<compile_context>
chip_gen: v5e
topology: v5e:2x2
jax: 0.10.0
libtpu: 0.0.40
codegen_flags: <defaults>
</compile_context>

<pallas_src>
import functools

import jax
import jax.numpy as jnp
from jax import lax
from jax.experimental import pallas as pl
from jax.experimental.pallas import tpu as pltpu


def _round_up(x, m):
    return ((x + m - 1) // m) * m


def _sigmoid_via_tanh(x):
    # sigmoid(x) == 0.5 * tanh(0.5 * x) + 0.5  -> one EUP op per element.
    return 0.5 * jnp.tanh(0.5 * x) + 0.5


def _lstm_classifier_kernel(pg_ref, whh_ref, fcw_ref, fcb_ref, out_ref,
                            h_scr, c_scr, *, seq_len, unroll):
    # pg_ref : (Tc, Tb, 4H) bf16  precomputed input gates (x@W_ih + b), time-major
    # whh_ref: (H, 4H)      bf16  hidden->gates weight (transposed vs torch)
    # fcw_ref: (H, 128)     bf16  fc weight, zero-padded to lane-dense width
    # fcb_ref: (1, 128)     f32   fc bias, zero-padded
    # out_ref: (Tb, 128)    f32   padded logits
    # h_scr / c_scr : (Tb, H) f32 recurrent state, persists across time chunks
    Tc, Tb, _ = pg_ref.shape
    H = whh_ref.shape[0]
    ti = pl.program_id(1)

    # (Re)initialize recurrent state at the start of each batch tile's sweep.
    @pl.when(ti == 0)
    def _():
        h_scr[...] = jnp.zeros_like(h_scr)
        c_scr[...] = jnp.zeros_like(c_scr)

    whh = whh_ref[...]  # (H, 4H) bf16, resident

    def step(t, carry):
        h = h_scr[...]
        gates = (pg_ref[t].astype(jnp.float32)
                 + jnp.dot(h.astype(jnp.bfloat16), whh,
                           preferred_element_type=jnp.float32))
        # PyTorch gate ordering [i, f, g, o]; H % 128 == 0 -> lane-aligned slices.
        i = _sigmoid_via_tanh(gates[:, 0 * H:1 * H])
        f = _sigmoid_via_tanh(gates[:, 1 * H:2 * H])
        g = jnp.tanh(gates[:, 2 * H:3 * H])
        o = _sigmoid_via_tanh(gates[:, 3 * H:4 * H])
        c_new = f * c_scr[...] + i * g
        c_scr[...] = c_new
        h_scr[...] = o * jnp.tanh(c_new)
        return carry

    if seq_len % Tc == 0:
        # Full chunk: static trip count, unrolled for LLO scheduling visibility.
        lax.fori_loop(0, Tc, step, 0, unroll=unroll)
    else:
        # Ragged final chunk: dynamic bound, no unroll.
        n_valid = jnp.minimum(Tc, seq_len - ti * Tc)
        lax.fori_loop(0, n_valid, step, 0)

    # Classifier head on the final time chunk only; lane-dense 128-wide output.
    @pl.when(ti == pl.num_programs(1) - 1)
    def _():
        out_ref[...] = (jnp.dot(h_scr[...].astype(jnp.bfloat16), fcw_ref[...],
                                preferred_element_type=jnp.float32)
                        + fcb_ref[...])


def _choose_tiles(B, T, H, time_chunk):
    # Batch tile: guarantee >= 2 tiles when batch allows so the "parallel" axis
    # can feed both v7x TensorCores; keep Tb a multiple of 16 (bf16 sublanes).
    if B >= 256:
        Tb = 128
        B_pad = _round_up(B, Tb)
    elif B >= 32:
        B_pad = _round_up(B, 32)
        Tb = B_pad // 2
    else:
        B_pad = _round_up(max(B, 16), 16)
        Tb = B_pad

    # Time chunk: largest chunk whose double-buffered bf16 gate stream plus
    # resident weights / state fits a v7x-safe VMEM budget.
    budget = 36 * 1024 * 1024
    fixed = (2 * H * 4 * H * 2        # W_hh (double-buffered, bf16)
             + 2 * H * 128 * 2        # fc W
             + 2 * 128 * 4            # fc b
             + 2 * Tb * H * 4         # h, c scratch
             + 2 * Tb * 128 * 4)      # output block
    Tc = max(1, min(time_chunk, T))
    while Tc > 8 and 2 * Tc * Tb * 4 * H * 2 + fixed > budget:
        Tc = (Tc + 1) // 2
    return B_pad, Tb, Tc


def lstm_classifier_forward(token_ids, params, *, time_chunk=64):
    """token_ids: (B, T) int32. Returns logits (B, output_dim) in float32."""
    emb_table, wih, whh, b, fcw, fcb = params
    B, T = token_ids.shape
    H = whh.shape[0]
    O = fcw.shape[1]
    assert H % 128 == 0, "gate slicing assumes lane-aligned hidden dim"
    assert O <= 128, "classifier output padded to a single 128-lane block"

    B_pad, Tb, Tc = _choose_tiles(B, T, H, time_chunk)
    T_pad = _round_up(T, Tc)
    O_pad = 128

    hi = lax.Precision.HIGHEST
    # ---- wrapper glue ----------------------------------------------------
    # Fold the input projection + combined bias into the embedding table once
    # (f32, pre-rounding), then gather per-token precomputed gates directly in
    # time-major order as bf16 and pad once.
    proj = jnp.dot(emb_table, wih, precision=hi) + b          # (V, 4H) f32
    proj = proj.astype(jnp.bfloat16)
    pg = jnp.take(proj, token_ids.T, axis=0)                  # (T, B, 4H) bf16
    pg = jnp.pad(pg, ((0, T_pad - T), (0, B_pad - B), (0, 0)))

    fcw_p = jnp.pad(fcw, ((0, 0), (0, O_pad - O))).astype(jnp.bfloat16)
    fcb_p = jnp.pad(fcb, ((0, 0), (0, O_pad - O)))

    grid = (B_pad // Tb, T_pad // Tc)
    unroll = True if Tc <= 8 else 4

    in_specs = [
        pl.BlockSpec((Tc, Tb, 4 * H), lambda bi, ti: (ti, bi, 0)),  # gate chunks
        pl.BlockSpec((H, 4 * H), lambda bi, ti: (0, 0)),            # W_hh
        pl.BlockSpec((H, O_pad), lambda bi, ti: (0, 0)),            # fc W (padded)
        pl.BlockSpec((1, O_pad), lambda bi, ti: (0, 0)),            # fc b (padded)
    ]
    out_specs = pl.BlockSpec((Tb, O_pad), lambda bi, ti: (bi, 0))
    scratch_shapes = [
        pltpu.VMEM((Tb, H), jnp.float32),   # h
        pltpu.VMEM((Tb, H), jnp.float32),   # c
    ]

    flops = 2 * T_pad * B_pad * H * 4 * H + 2 * B_pad * H * O_pad
    transcendentals = T_pad * B_pad * 5 * H
    bytes_accessed = (pg.size * 2 + whh.size * 2 + fcw_p.size * 2
                      + fcb_p.size * 4 + B_pad * O_pad * 4)

    out = pl.pallas_call(
        functools.partial(_lstm_classifier_kernel, seq_len=T, unroll=unroll),
        out_shape=jax.ShapeDtypeStruct((B_pad, O_pad), jnp.float32),
        grid_spec=pltpu.PrefetchScalarGridSpec(
            num_scalar_prefetch=0,
            grid=grid,
            in_specs=in_specs,
            out_specs=out_specs,
            scratch_shapes=scratch_shapes),
        compiler_params=pltpu.CompilerParams(
            dimension_semantics=("parallel", "arbitrary"),
            vmem_limit_bytes=40 * 1024 * 1024),
        cost_estimate=pl.CostEstimate(flops=flops,
                                      transcendentals=transcendentals,
                                      bytes_accessed=bytes_accessed),
    )(pg, whh.astype(jnp.bfloat16), fcw_p, fcb_p)

    return out[:B, :O]


def lstm_classifier_reference(token_ids, params):
    """Pure-JAX f32 reference (mirrors torch.nn.LSTM batch_first forward)."""
    emb_table, wih, whh, b, fcw, fcb = params
    H = whh.shape[0]
    embedded = jnp.take(emb_table, token_ids, axis=0)   # (B, T, E)
    embedded = jnp.transpose(embedded, (1, 0, 2))       # (T, B, E)
    B = embedded.shape[1]
    hi = lax.Precision.HIGHEST

    def step(carry, x_t):
        h, c = carry
        gates = (jnp.dot(x_t, wih, precision=hi)
                 + jnp.dot(h, whh, precision=hi) + b)
        i = jax.nn.sigmoid(gates[:, 0 * H:1 * H])
        f = jax.nn.sigmoid(gates[:, 1 * H:2 * H])
        g = jnp.tanh(gates[:, 2 * H:3 * H])
        o = jax.nn.sigmoid(gates[:, 3 * H:4 * H])
        c_new = f * c + i * g
        h_new = o * jnp.tanh(c_new)
        return (h_new, c_new), None

    (h_last, _), _ = lax.scan(step,
                              (jnp.zeros((B, H), jnp.float32),
                               jnp.zeros((B, H), jnp.float32)),
                              embedded)
    return jnp.dot(h_last, fcw, precision=hi) + fcb


def init_params(key, vocab_size, embed_dim, hidden_dim, output_dim):
    k = jax.random.split(key, 6)
    s = 1.0 / jnp.sqrt(jnp.float32(hidden_dim))
    emb_table = 0.1 * jax.random.normal(k[0], (vocab_size, embed_dim),
                                        jnp.float32)
    # padding_idx = word2idx['PAD'] = 0 -> zero embedding row.
    emb_table = emb_table.at[0].set(0.0)
    wih = jax.random.uniform(k[1], (embed_dim, 4 * hidden_dim), jnp.float32,
                             -s, s)
    whh = jax.random.uniform(k[2], (hidden_dim, 4 * hidden_dim), jnp.float32,
                             -s, s)
    b = jax.random.uniform(k[3], (1, 4 * hidden_dim), jnp.float32, -s, s)
    fcw = jax.random.uniform(k[4], (hidden_dim, output_dim), jnp.float32,
                             -s, s)
    fcb = jax.random.uniform(k[5], (1, output_dim), jnp.float32, -s, s)
    return (emb_table, wih, whh, b, fcw, fcb)


if __name__ == "__main__":
    # Small, forward-consistent shapes.
    vocab_size = 50
    embed_dim = 32
    hidden_dim = 128
    output_dim = 3
    batch = 2
    seq_len = 8

    key = jax.random.PRNGKey(0)
    k_params, k_tokens = jax.random.split(key)
    params = init_params(k_params, vocab_size, embed_dim, hidden_dim,
                         output_dim)
    token_ids = jax.random.randint(k_tokens, (batch, seq_len), 0, vocab_size,
                                   dtype=jnp.int32)

    logits = lstm_classifier_forward(token_ids, params)
    logits = jax.block_until_ready(logits)

    ref = jax.block_until_ready(lstm_classifier_reference(token_ids, params))
    assert logits.shape == (batch, output_dim)
    # Kernel uses bf16 MXU operands / bf16 precomputed gates (f32 accumulation);
    # compare against the f32 reference with a bf16-appropriate tolerance.
    assert jnp.allclose(logits, ref, atol=1e-2, rtol=1e-2), (logits, ref)

    print("KERNEL_OK")
</pallas_src>

<mosaic_0001>
module attributes {stable_mosaic.version = 11 : i64} {
  func.func @_lstm_classifier_kernel(%arg0: i32, %arg1: i32, %arg2: memref<8x16x512xbf16, #tpu.memory_space<vmem>>, %arg3: memref<128x512xbf16, #tpu.memory_space<vmem>>, %arg4: memref<128x128xbf16, #tpu.memory_space<vmem>>, %arg5: memref<1x128xf32, #tpu.memory_space<vmem>>, %arg6: memref<16x128xf32, #tpu.memory_space<vmem>>, %arg7: memref<16x128xf32, #tpu.memory_space<vmem>>, %arg8: memref<16x128xf32, #tpu.memory_space<vmem>>) attributes {dimension_semantics = [#tpu.dimension_semantics<parallel>, #tpu.dimension_semantics<arbitrary>], iteration_bounds = array<i64: 1, 1>, scalar_prefetch = 0 : i64, scratch_operands = 2 : i64, tpu.core_type = #tpu.core_type<tc>, window_params = [{transform_indices = @transform_0, window_bounds = array<i64: 8, 16, 512>}, {pipeline_mode = #tpu.pipeline_mode<synchronous>, transform_indices = @transform_1, window_bounds = array<i64: 128, 512>}, {pipeline_mode = #tpu.pipeline_mode<synchronous>, transform_indices = @transform_2, window_bounds = array<i64: 128, 128>}, {pipeline_mode = #tpu.pipeline_mode<synchronous>, transform_indices = @transform_3, window_bounds = array<i64: 1, 128>}, {transform_indices = @transform_4, window_bounds = array<i64: 16, 128>}]} {
    %c0_i32 = arith.constant 0 : i32
    %0 = arith.cmpi eq, %arg1, %c0_i32 : i32
    %1 = arith.extui %0 : i1 to i32
    %c0_i32_0 = arith.constant 0 : i32
    %2 = arith.cmpi ne, %1, %c0_i32_0 : i32
    scf.if %2 {
      %cst_164 = arith.constant 0.000000e+00 : f32
      %343 = vector.broadcast %cst_164 : f32 to vector<16x128xf32>
      %c0_165 = arith.constant 0 : index
      %c0_166 = arith.constant 0 : index
      %344 = vector.load %arg7[%c0_165, %c0_166] : memref<16x128xf32, #tpu.memory_space<vmem>>, vector<16x128xf32>
      tpu.vector_store %arg7[%c0_165, %c0_166], %343 {strides = array<i32>} : memref<16x128xf32, #tpu.memory_space<vmem>>, vector<16x128xf32>,
      %cst_167 = arith.constant 0.000000e+00 : f32
      %345 = vector.broadcast %cst_167 : f32 to vector<16x128xf32>
      %c0_168 = arith.constant 0 : index
      %c0_169 = arith.constant 0 : index
      %346 = vector.load %arg8[%c0_168, %c0_169] : memref<16x128xf32, #tpu.memory_space<vmem>>, vector<16x128xf32>
      tpu.vector_store %arg8[%c0_168, %c0_169], %345 {strides = array<i32>} : memref<16x128xf32, #tpu.memory_space<vmem>>, vector<16x128xf32>,
    } else {
    }
    %c0 = arith.constant 0 : index
    %c0_1 = arith.constant 0 : index
    %3 = vector.load %arg3[%c0, %c0_1] : memref<128x512xbf16, #tpu.memory_space<vmem>>, vector<128x512xbf16>
    %c0_i32_2 = arith.constant 0 : i32
    %c0_3 = arith.constant 0 : index
    %c0_4 = arith.constant 0 : index
    %4 = vector.load %arg7[%c0_3, %c0_4] : memref<16x128xf32, #tpu.memory_space<vmem>>, vector<16x128xf32>
    %5 = arith.index_cast %c0_i32_2 : i32 to index
    %c0_5 = arith.constant 0 : index
    %c0_6 = arith.constant 0 : index
    %6 = vector.load %arg2[%5, %c0_5, %c0_6] : memref<8x16x512xbf16, #tpu.memory_space<vmem>>, vector<1x16x512xbf16>
    %7 = vector.shape_cast %6 : vector<1x16x512xbf16> to vector<16x512xbf16>
    %8 = arith.extf %7 : vector<16x512xbf16> to vector<16x512xf32>
    %9 = arith.truncf %4 : vector<16x128xf32> to vector<16x128xbf16>
    %cst = arith.constant dense<0.000000e+00> : vector<16x512xf32>
    %10 = tpu.matmul %9, %3, %cst {dimension_numbers = #tpu.dot_dimension_numbers<[1], [0], [0], [1], [0, 0, 1, 1], [], []>} : vector<16x128xbf16>, vector<128x512xbf16>, vector<16x512xf32> -> vector<16x512xf32>
    %11 = arith.addf %8, %10 : vector<16x512xf32>
    %12 = vector.extract_strided_slice %11 {offsets = [0, 0], sizes = [16, 128], strides = [1, 1]} : vector<16x512xf32> to vector<16x128xf32>
    %cst_7 = arith.constant 5.000000e-01 : f32
    %13 = vector.broadcast %cst_7 : f32 to vector<16x128xf32>
    %14 = arith.mulf %13, %12 : vector<16x128xf32>
    %15 = math.tanh %14 : vector<16x128xf32>
    %cst_8 = arith.constant 5.000000e-01 : f32
    %16 = vector.broadcast %cst_8 : f32 to vector<16x128xf32>
    %17 = arith.mulf %16, %15 : vector<16x128xf32>
    %cst_9 = arith.constant 5.000000e-01 : f32
    %18 = vector.broadcast %cst_9 : f32 to vector<16x128xf32>
    %19 = arith.addf %17, %18 : vector<16x128xf32>
    %20 = vector.extract_strided_slice %11 {offsets = [0, 128], sizes = [16, 128], strides = [1, 1]} : vector<16x512xf32> to vector<16x128xf32>
    %cst_10 = arith.constant 5.000000e-01 : f32
    %21 = vector.broadcast %cst_10 : f32 to vector<16x128xf32>
    %22 = arith.mulf %21, %20 : vector<16x128xf32>
    %23 = math.tanh %22 : vector<16x128xf32>
    %cst_11 = arith.constant 5.000000e-01 : f32
    %24 = vector.broadcast %cst_11 : f32 to vector<16x128xf32>
    %25 = arith.mulf %24, %23 : vector<16x128xf32>
    %cst_12 = arith.constant 5.000000e-01 : f32
    %26 = vector.broadcast %cst_12 : f32 to vector<16x128xf32>
    %27 = arith.addf %25, %26 : vector<16x128xf32>
    %28 = vector.extract_strided_slice %11 {offsets = [0, 256], sizes = [16, 128], strides = [1, 1]} : vector<16x512xf32> to vector<16x128xf32>
    %29 = math.tanh %28 : vector<16x128xf32>
    %30 = vector.extract_strided_slice %11 {offsets = [0, 384], sizes = [16, 128], strides = [1, 1]} : vector<16x512xf32> to vector<16x128xf32>
    %cst_13 = arith.constant 5.000000e-01 : f32
    %31 = vector.broadcast %cst_13 : f32 to vector<16x128xf32>
    %32 = arith.mulf %31, %30 : vector<16x128xf32>
    %33 = math.tanh %32 : vector<16x128xf32>
    %cst_14 = arith.constant 5.000000e-01 : f32
    %34 = vector.broadcast %cst_14 : f32 to vector<16x128xf32>
    %35 = arith.mulf %34, %33 : vector<16x128xf32>
    %cst_15 = arith.constant 5.000000e-01 : f32
    %36 = vector.broadcast %cst_15 : f32 to vector<16x128xf32>
    %37 = arith.addf %35, %36 : vector<16x128xf32>
    %c0_16 = arith.constant 0 : index
    %c0_17 = arith.constant 0 : index
    %38 = vector.load %arg8[%c0_16, %c0_17] : memref<16x128xf32, #tpu.memory_space<vmem>>, vector<16x128xf32>
    %39 = arith.mulf %27, %38 : vector<16x128xf32>
    %40 = arith.mulf %19, %29 : vector<16x128xf32>
    %41 = arith.addf %39, %40 : vector<16x128xf32>
    %c0_18 = arith.constant 0 : index
    %c0_19 = arith.constant 0 : index
    %42 = vector.load %arg8[%c0_18, %c0_19] : memref<16x128xf32, #tpu.memory_space<vmem>>, vector<16x128xf32>
    tpu.vector_store %arg8[%c0_18, %c0_19], %41 {strides = array<i32>} : memref<16x128xf32, #tpu.memory_space<vmem>>, vector<16x128xf32>,
    %43 = math.tanh %41 : vector<16x128xf32>
    %44 = arith.mulf %37, %43 : vector<16x128xf32>
    %c0_20 = arith.constant 0 : index
    %c0_21 = arith.constant 0 : index
    %45 = vector.load %arg7[%c0_20, %c0_21] : memref<16x128xf32, #tpu.memory_space<vmem>>, vector<16x128xf32>
    tpu.vector_store %arg7[%c0_20, %c0_21], %44 {strides = array<i32>} : memref<16x128xf32, #tpu.memory_space<vmem>>, vector<16x128xf32>,
    %c1_i32 = arith.constant 1 : i32
    %c0_22 = arith.constant 0 : index
    %c0_23 = arith.constant 0 : index
    %46 = vector.load %arg7[%c0_22, %c0_23] : memref<16x128xf32, #tpu.memory_space<vmem>>, vector<16x128xf32>
    %47 = arith.index_cast %c1_i32 : i32 to index
    %c0_24 = arith.constant 0 : index
    %c0_25 = arith.constant 0 : index
    %48 = vector.load %arg2[%47, %c0_24, %c0_25] : memref<8x16x512xbf16, #tpu.memory_space<vmem>>, vector<1x16x512xbf16>
    %49 = vector.shape_cast %48 : vector<1x16x512xbf16> to vector<16x512xbf16>
    %50 = arith.extf %49 : vector<16x512xbf16> to vector<16x512xf32>
    %51 = arith.truncf %46 : vector<16x128xf32> to vector<16x128xbf16>
    %cst_26 = arith.constant dense<0.000000e+00> : vector<16x512xf32>
    %52 = tpu.matmul %51, %3, %cst_26 {dimension_numbers = #tpu.dot_dimension_numbers<[1], [0], [0], [1], [0, 0, 1, 1], [], []>} : vector<16x128xbf16>, vector<128x512xbf16>, vector<16x512xf32> -> vector<16x512xf32>
    %53 = arith.addf %50, %52 : vector<16x512xf32>
    %54 = vector.extract_strided_slice %53 {offsets = [0, 0], sizes = [16, 128], strides = [1, 1]} : vector<16x512xf32> to vector<16x128xf32>
    %cst_27 = arith.constant 5.000000e-01 : f32
    %55 = vector.broadcast %cst_27 : f32 to vector<16x128xf32>
    %56 = arith.mulf %55, %54 : vector<16x128xf32>
    %57 = math.tanh %56 : vector<16x128xf32>
    %cst_28 = arith.constant 5.000000e-01 : f32
    %58 = vector.broadcast %cst_28 : f32 to vector<16x128xf32>
    %59 = arith.mulf %58, %57 : vector<16x128xf32>
    %cst_29 = arith.constant 5.000000e-01 : f32
    %60 = vector.broadcast %cst_29 : f32 to vector<16x128xf32>
    %61 = arith.addf %59, %60 : vector<16x128xf32>
    %62 = vector.extract_strided_slice %53 {offsets = [0, 128], sizes = [16, 128], strides = [1, 1]} : vector<16x512xf32> to vector<16x128xf32>
    %cst_30 = arith.constant 5.000000e-01 : f32
    %63 = vector.broadcast %cst_30 : f32 to vector<16x128xf32>
    %64 = arith.mulf %63, %62 : vector<16x128xf32>
    %65 = math.tanh %64 : vector<16x128xf32>
    %cst_31 = arith.constant 5.000000e-01 : f32
    %66 = vector.broadcast %cst_31 : f32 to vector<16x128xf32>
    %67 = arith.mulf %66, %65 : vector<16x128xf32>
    %cst_32 = arith.constant 5.000000e-01 : f32
    %68 = vector.broadcast %cst_32 : f32 to vector<16x128xf32>
    %69 = arith.addf %67, %68 : vector<16x128xf32>
    %70 = vector.extract_strided_slice %53 {offsets = [0, 256], sizes = [16, 128], strides = [1, 1]} : vector<16x512xf32> to vector<16x128xf32>
    %71 = math.tanh %70 : vector<16x128xf32>
    %72 = vector.extract_strided_slice %53 {offsets = [0, 384], sizes = [16, 128], strides = [1, 1]} : vector<16x512xf32> to vector<16x128xf32>
    %cst_33 = arith.constant 5.000000e-01 : f32
    %73 = vector.broadcast %cst_33 : f32 to vector<16x128xf32>
    %74 = arith.mulf %73, %72 : vector<16x128xf32>
    %75 = math.tanh %74 : vector<16x128xf32>
    %cst_34 = arith.constant 5.000000e-01 : f32
    %76 = vector.broadcast %cst_34 : f32 to vector<16x128xf32>
    %77 = arith.mulf %76, %75 : vector<16x128xf32>
    %cst_35 = arith.constant 5.000000e-01 : f32
    %78 = vector.broadcast %cst_35 : f32 to vector<16x128xf32>
    %79 = arith.addf %77, %78 : vector<16x128xf32>
    %c0_36 = arith.constant 0 : index
    %c0_37 = arith.constant 0 : index
    %80 = vector.load %arg8[%c0_36, %c0_37] : memref<16x128xf32, #tpu.memory_space<vmem>>, vector<16x128xf32>
    %81 = arith.mulf %69, %80 : vector<16x128xf32>
    %82 = arith.mulf %61, %71 : vector<16x128xf32>
    %83 = arith.addf %81, %82 : vector<16x128xf32>
    %c0_38 = arith.constant 0 : index
    %c0_39 = arith.constant 0 : index
    %84 = vector.load %arg8[%c0_38, %c0_39] : memref<16x128xf32, #tpu.memory_space<vmem>>, vector<16x128xf32>
    tpu.vector_store %arg8[%c0_38, %c0_39], %83 {strides = array<i32>} : memref<16x128xf32, #tpu.memory_space<vmem>>, vector<16x128xf32>,
    %85 = math.tanh %83 : vector<16x128xf32>
    %86 = arith.mulf %79, %85 : vector<16x128xf32>
    %c0_40 = arith.constant 0 : index
    %c0_41 = arith.constant 0 : index
    %87 = vector.load %arg7[%c0_40, %c0_41] : memref<16x128xf32, #tpu.memory_space<vmem>>, vector<16x128xf32>
    tpu.vector_store %arg7[%c0_40, %c0_41], %86 {strides = array<i32>} : memref<16x128xf32, #tpu.memory_space<vmem>>, vector<16x128xf32>,
    %c2_i32 = arith.constant 2 : i32
    %c0_42 = arith.constant 0 : index
    %c0_43 = arith.constant 0 : index
    %88 = vector.load %arg7[%c0_42, %c0_43] : memref<16x128xf32, #tpu.memory_space<vmem>>, vector<16x128xf32>
    %89 = arith.index_cast %c2_i32 : i32 to index
    %c0_44 = arith.constant 0 : index
    %c0_45 = arith.constant 0 : index
    %90 = vector.load %arg2[%89, %c0_44, %c0_45] : memref<8x16x512xbf16, #tpu.memory_space<vmem>>, vector<1x16x512xbf16>
    %91 = vector.shape_cast %90 : vector<1x16x512xbf16> to vector<16x512xbf16>
    %92 = arith.extf %91 : vector<16x512xbf16> to vector<16x512xf32>
    %93 = arith.truncf %88 : vector<16x128xf32> to vector<16x128xbf16>
    %cst_46 = arith.constant dense<0.000000e+00> : vector<16x512xf32>
    %94 = tpu.matmul %93, %3, %cst_46 {dimension_numbers = #tpu.dot_dimension_numbers<[1], [0], [0], [1], [0, 0, 1, 1], [], []>} : vector<16x128xbf16>, vector<128x512xbf16>, vector<16x512xf32> -> vector<16x512xf32>
    %95 = arith.addf %92, %94 : vector<16x512xf32>
    %96 = vector.extract_strided_slice %95 {offsets = [0, 0], sizes = [16, 128], strides = [1, 1]} : vector<16x512xf32> to vector<16x128xf32>
    %cst_47 = arith.constant 5.000000e-01 : f32
    %97 = vector.broadcast %cst_47 : f32 to vector<16x128xf32>
    %98 = arith.mulf %97, %96 : vector<16x128xf32>
    %99 = math.tanh %98 : vector<16x128xf32>
    %cst_48 = arith.constant 5.000000e-01 : f32
    %100 = vector.broadcast %cst_48 : f32 to vector<16x128xf32>
    %101 = arith.mulf %100, %99 : vector<16x128xf32>
    %cst_49 = arith.constant 5.000000e-01 : f32
    %102 = vector.broadcast %cst_49 : f32 to vector<16x128xf32>
    %103 = arith.addf %101, %102 : vector<16x128xf32>
    %104 = vector.extract_strided_slice %95 {offsets = [0, 128], sizes = [16, 128], strides = [1, 1]} : vector<16x512xf32> to vector<16x128xf32>
    %cst_50 = arith.constant 5.000000e-01 : f32
    %105 = vector.broadcast %cst_50 : f32 to vector<16x128xf32>
    %106 = arith.mulf %105, %104 : vector<16x128xf32>
    %107 = math.tanh %106 : vector<16x128xf32>
    %cst_51 = arith.constant 5.000000e-01 : f32
    %108 = vector.broadcast %cst_51 : f32 to vector<16x128xf32>
    %109 = arith.mulf %108, %107 : vector<16x128xf32>
    %cst_52 = arith.constant 5.000000e-01 : f32
    %110 = vector.broadcast %cst_52 : f32 to vector<16x128xf32>
    %111 = arith.addf %109, %110 : vector<16x128xf32>
    %112 = vector.extract_strided_slice %95 {offsets = [0, 256], sizes = [16, 128], strides = [1, 1]} : vector<16x512xf32> to vector<16x128xf32>
    %113 = math.tanh %112 : vector<16x128xf32>
    %114 = vector.extract_strided_slice %95 {offsets = [0, 384], sizes = [16, 128], strides = [1, 1]} : vector<16x512xf32> to vector<16x128xf32>
    %cst_53 = arith.constant 5.000000e-01 : f32
    %115 = vector.broadcast %cst_53 : f32 to vector<16x128xf32>
    %116 = arith.mulf %115, %114 : vector<16x128xf32>
    %117 = math.tanh %116 : vector<16x128xf32>
    %cst_54 = arith.constant 5.000000e-01 : f32
    %118 = vector.broadcast %cst_54 : f32 to vector<16x128xf32>
    %119 = arith.mulf %118, %117 : vector<16x128xf32>
    %cst_55 = arith.constant 5.000000e-01 : f32
    %120 = vector.broadcast %cst_55 : f32 to vector<16x128xf32>
    %121 = arith.addf %119, %120 : vector<16x128xf32>
    %c0_56 = arith.constant 0 : index
    %c0_57 = arith.constant 0 : index
    %122 = vector.load %arg8[%c0_56, %c0_57] : memref<16x128xf32, #tpu.memory_space<vmem>>, vector<16x128xf32>
    %123 = arith.mulf %111, %122 : vector<16x128xf32>
    %124 = arith.mulf %103, %113 : vector<16x128xf32>
    %125 = arith.addf %123, %124 : vector<16x128xf32>
    %c0_58 = arith.constant 0 : index
    %c0_59 = arith.constant 0 : index
    %126 = vector.load %arg8[%c0_58, %c0_59] : memref<16x128xf32, #tpu.memory_space<vmem>>, vector<16x128xf32>
    tpu.vector_store %arg8[%c0_58, %c0_59], %125 {strides = array<i32>} : memref<16x128xf32, #tpu.memory_space<vmem>>, vector<16x128xf32>,
    %127 = math.tanh %125 : vector<16x128xf32>
    %128 = arith.mulf %121, %127 : vector<16x128xf32>
    %c0_60 = arith.constant 0 : index
    %c0_61 = arith.constant 0 : index
    %129 = vector.load %arg7[%c0_60, %c0_61] : memref<16x128xf32, #tpu.memory_space<vmem>>, vector<16x128xf32>
    tpu.vector_store %arg7[%c0_60, %c0_61], %128 {strides = array<i32>} : memref<16x128xf32, #tpu.memory_space<vmem>>, vector<16x128xf32>,
    %c3_i32 = arith.constant 3 : i32
    %c0_62 = arith.constant 0 : index
    %c0_63 = arith.constant 0 : index
    %130 = vector.load %arg7[%c0_62, %c0_63] : memref<16x128xf32, #tpu.memory_space<vmem>>, vector<16x128xf32>
    %131 = arith.index_cast %c3_i32 : i32 to index
    %c0_64 = arith.constant 0 : index
    %c0_65 = arith.constant 0 : index
    %132 = vector.load %arg2[%131, %c0_64, %c0_65] : memref<8x16x512xbf16, #tpu.memory_space<vmem>>, vector<1x16x512xbf16>
    %133 = vector.shape_cast %132 : vector<1x16x512xbf16> to vector<16x512xbf16>
    %134 = arith.extf %133 : vector<16x512xbf16> to vector<16x512xf32>
    %135 = arith.truncf %130 : vector<16x128xf32> to vector<16x128xbf16>
    %cst_66 = arith.constant dense<0.000000e+00> : vector<16x512xf32>
    %136 = tpu.matmul %135, %3, %cst_66 {dimension_numbers = #tpu.dot_dimension_numbers<[1], [0], [0], [1], [0, 0, 1, 1], [], []>} : vector<16x128xbf16>, vector<128x512xbf16>, vector<16x512xf32> -> vector<16x512xf32>
    %137 = arith.addf %134, %136 : vector<16x512xf32>
    %138 = vector.extract_strided_slice %137 {offsets = [0, 0], sizes = [16, 128], strides = [1, 1]} : vector<16x512xf32> to vector<16x128xf32>
    %cst_67 = arith.constant 5.000000e-01 : f32
    %139 = vector.broadcast %cst_67 : f32 to vector<16x128xf32>
    %140 = arith.mulf %139, %138 : vector<16x128xf32>
    %141 = math.tanh %140 : vector<16x128xf32>
    %cst_68 = arith.constant 5.000000e-01 : f32
    %142 = vector.broadcast %cst_68 : f32 to vector<16x128xf32>
    %143 = arith.mulf %142, %141 : vector<16x128xf32>
    %cst_69 = arith.constant 5.000000e-01 : f32
    %144 = vector.broadcast %cst_69 : f32 to vector<16x128xf32>
    %145 = arith.addf %143, %144 : vector<16x128xf32>
    %146 = vector.extract_strided_slice %137 {offsets = [0, 128], sizes = [16, 128], strides = [1, 1]} : vector<16x512xf32> to vector<16x128xf32>
    %cst_70 = arith.constant 5.000000e-01 : f32
    %147 = vector.broadcast %cst_70 : f32 to vector<16x128xf32>
    %148 = arith.mulf %147, %146 : vector<16x128xf32>
    %149 = math.tanh %148 : vector<16x128xf32>
    %cst_71 = arith.constant 5.000000e-01 : f32
    %150 = vector.broadcast %cst_71 : f32 to vector<16x128xf32>
    %151 = arith.mulf %150, %149 : vector<16x128xf32>
    %cst_72 = arith.constant 5.000000e-01 : f32
    %152 = vector.broadcast %cst_72 : f32 to vector<16x128xf32>
    %153 = arith.addf %151, %152 : vector<16x128xf32>
    %154 = vector.extract_strided_slice %137 {offsets = [0, 256], sizes = [16, 128], strides = [1, 1]} : vector<16x512xf32> to vector<16x128xf32>
    %155 = math.tanh %154 : vector<16x128xf32>
    %156 = vector.extract_strided_slice %137 {offsets = [0, 384], sizes = [16, 128], strides = [1, 1]} : vector<16x512xf32> to vector<16x128xf32>
    %cst_73 = arith.constant 5.000000e-01 : f32
    %157 = vector.broadcast %cst_73 : f32 to vector<16x128xf32>
    %158 = arith.mulf %157, %156 : vector<16x128xf32>
    %159 = math.tanh %158 : vector<16x128xf32>
    %cst_74 = arith.constant 5.000000e-01 : f32
    %160 = vector.broadcast %cst_74 : f32 to vector<16x128xf32>
    %161 = arith.mulf %160, %159 : vector<16x128xf32>
    %cst_75 = arith.constant 5.000000e-01 : f32
    %162 = vector.broadcast %cst_75 : f32 to vector<16x128xf32>
    %163 = arith.addf %161, %162 : vector<16x128xf32>
    %c0_76 = arith.constant 0 : index
    %c0_77 = arith.constant 0 : index
    %164 = vector.load %arg8[%c0_76, %c0_77] : memref<16x128xf32, #tpu.memory_space<vmem>>, vector<16x128xf32>
    %165 = arith.mulf %153, %164 : vector<16x128xf32>
    %166 = arith.mulf %145, %155 : vector<16x128xf32>
    %167 = arith.addf %165, %166 : vector<16x128xf32>
    %c0_78 = arith.constant 0 : index
    %c0_79 = arith.constant 0 : index
    %168 = vector.load %arg8[%c0_78, %c0_79] : memref<16x128xf32, #tpu.memory_space<vmem>>, vector<16x128xf32>
    tpu.vector_store %arg8[%c0_78, %c0_79], %167 {strides = array<i32>} : memref<16x128xf32, #tpu.memory_space<vmem>>, vector<16x128xf32>,
    %169 = math.tanh %167 : vector<16x128xf32>
    %170 = arith.mulf %163, %169 : vector<16x128xf32>
    %c0_80 = arith.constant 0 : index
    %c0_81 = arith.constant 0 : index
    %171 = vector.load %arg7[%c0_80, %c0_81] : memref<16x128xf32, #tpu.memory_space<vmem>>, vector<16x128xf32>
    tpu.vector_store %arg7[%c0_80, %c0_81], %170 {strides = array<i32>} : memref<16x128xf32, #tpu.memory_space<vmem>>, vector<16x128xf32>,
    %c4_i32 = arith.constant 4 : i32
    %c0_82 = arith.constant 0 : index
    %c0_83 = arith.constant 0 : index
    %172 = vector.load %arg7[%c0_82, %c0_83] : memref<16x128xf32, #tpu.memory_space<vmem>>, vector<16x128xf32>
    %173 = arith.index_cast %c4_i32 : i32 to index
    %c0_84 = arith.constant 0 : index
    %c0_85 = arith.constant 0 : index
    %174 = vector.load %arg2[%173, %c0_84, %c0_85] : memref<8x16x512xbf16, #tpu.memory_space<vmem>>, vector<1x16x512xbf16>
    %175 = vector.shape_cast %174 : vector<1x16x512xbf16> to vector<16x512xbf16>
    %176 = arith.extf %175 : vector<16x512xbf16> to vector<16x512xf32>
    %177 = arith.truncf %172 : vector<16x128xf32> to vector<16x128xbf16>
    %cst_86 = arith.constant dense<0.000000e+00> : vector<16x512xf32>
    %178 = tpu.matmul %177, %3, %cst_86 {dimension_numbers = #tpu.dot_dimension_numbers<[1], [0], [0], [1], [0, 0, 1, 1], [], []>} : vector<16x128xbf16>, vector<128x512xbf16>, vector<16x512xf32> -> vector<16x512xf32>
    %179 = arith.addf %176, %178 : vector<16x512xf32>
    %180 = vector.extract_strided_slice %179 {offsets = [0, 0], sizes = [16, 128], strides = [1, 1]} : vector<16x512xf32> to vector<16x128xf32>
    %cst_87 = arith.constant 5.000000e-01 : f32
    %181 = vector.broadcast %cst_87 : f32 to vector<16x128xf32>
    %182 = arith.mulf %181, %180 : vector<16x128xf32>
    %183 = math.tanh %182 : vector<16x128xf32>
    %cst_88 = arith.constant 5.000000e-01 : f32
    %184 = vector.broadcast %cst_88 : f32 to vector<16x128xf32>
    %185 = arith.mulf %184, %183 : vector<16x128xf32>
    %cst_89 = arith.constant 5.000000e-01 : f32
    %186 = vector.broadcast %cst_89 : f32 to vector<16x128xf32>
    %187 = arith.addf %185, %186 : vector<16x128xf32>
    %188 = vector.extract_strided_slice %179 {offsets = [0, 128], sizes = [16, 128], strides = [1, 1]} : vector<16x512xf32> to vector<16x128xf32>
    %cst_90 = arith.constant 5.000000e-01 : f32
    %189 = vector.broadcast %cst_90 : f32 to vector<16x128xf32>
    %190 = arith.mulf %189, %188 : vector<16x128xf32>
    %191 = math.tanh %190 : vector<16x128xf32>
    %cst_91 = arith.constant 5.000000e-01 : f32
    %192 = vector.broadcast %cst_91 : f32 to vector<16x128xf32>
    %193 = arith.mulf %192, %191 : vector<16x128xf32>
    %cst_92 = arith.constant 5.000000e-01 : f32
    %194 = vector.broadcast %cst_92 : f32 to vector<16x128xf32>
    %195 = arith.addf %193, %194 : vector<16x128xf32>
    %196 = vector.extract_strided_slice %179 {offsets = [0, 256], sizes = [16, 128], strides = [1, 1]} : vector<16x512xf32> to vector<16x128xf32>
    %197 = math.tanh %196 : vector<16x128xf32>
    %198 = vector.extract_strided_slice %179 {offsets = [0, 384], sizes = [16, 128], strides = [1, 1]} : vector<16x512xf32> to vector<16x128xf32>
    %cst_93 = arith.constant 5.000000e-01 : f32
    %199 = vector.broadcast %cst_93 : f32 to vector<16x128xf32>
    %200 = arith.mulf %199, %198 : vector<16x128xf32>
    %201 = math.tanh %200 : vector<16x128xf32>
    %cst_94 = arith.constant 5.000000e-01 : f32
    %202 = vector.broadcast %cst_94 : f32 to vector<16x128xf32>
    %203 = arith.mulf %202, %201 : vector<16x128xf32>
    %cst_95 = arith.constant 5.000000e-01 : f32
    %204 = vector.broadcast %cst_95 : f32 to vector<16x128xf32>
    %205 = arith.addf %203, %204 : vector<16x128xf32>
    %c0_96 = arith.constant 0 : index
    %c0_97 = arith.constant 0 : index
    %206 = vector.load %arg8[%c0_96, %c0_97] : memref<16x128xf32, #tpu.memory_space<vmem>>, vector<16x128xf32>
    %207 = arith.mulf %195, %206 : vector<16x128xf32>
    %208 = arith.mulf %187, %197 : vector<16x128xf32>
    %209 = arith.addf %207, %208 : vector<16x128xf32>
    %c0_98 = arith.constant 0 : index
    %c0_99 = arith.constant 0 : index
    %210 = vector.load %arg8[%c0_98, %c0_99] : memref<16x128xf32, #tpu.memory_space<vmem>>, vector<16x128xf32>
    tpu.vector_store %arg8[%c0_98, %c0_99], %209 {strides = array<i32>} : memref<16x128xf32, #tpu.memory_space<vmem>>, vector<16x128xf32>,
    %211 = math.tanh %209 : vector<16x128xf32>
    %212 = arith.mulf %205, %211 : vector<16x128xf32>
    %c0_100 = arith.constant 0 : index
    %c0_101 = arith.constant 0 : index
    %213 = vector.load %arg7[%c0_100, %c0_101] : memref<16x128xf32, #tpu.memory_space<vmem>>, vector<16x128xf32>
    tpu.vector_store %arg7[%c0_100, %c0_101], %212 {strides = array<i32>} : memref<16x128xf32, #tpu.memory_space<vmem>>, vector<16x128xf32>,
    %c5_i32 = arith.constant 5 : i32
    %c0_102 = arith.constant 0 : index
    %c0_103 = arith.constant 0 : index
    %214 = vector.load %arg7[%c0_102, %c0_103] : memref<16x128xf32, #tpu.memory_space<vmem>>, vector<16x128xf32>
    %215 = arith.index_cast %c5_i32 : i32 to index
    %c0_104 = arith.constant 0 : index
    %c0_105 = arith.constant 0 : index
    %216 = vector.load %arg2[%215, %c0_104, %c0_105] : memref<8x16x512xbf16, #tpu.memory_space<vmem>>, vector<1x16x512xbf16>
    %217 = vector.shape_cast %216 : vector<1x16x512xbf16> to vector<16x512xbf16>
    %218 = arith.extf %217 : vector<16x512xbf16> to vector<16x512xf32>
    %219 = arith.truncf %214 : vector<16x128xf32> to vector<16x128xbf16>
    %cst_106 = arith.constant dense<0.000000e+00> : vector<16x512xf32>
    %220 = tpu.matmul %219, %3, %cst_106 {dimension_numbers = #tpu.dot_dimension_numbers<[1], [0], [0], [1], [0, 0, 1, 1], [], []>} : vector<16x128xbf16>, vector<128x512xbf16>, vector<16x512xf32> -> vector<16x512xf32>
    %221 = arith.addf %218, %220 : vector<16x512xf32>
    %222 = vector.extract_strided_slice %221 {offsets = [0, 0], sizes = [16, 128], strides = [1, 1]} : vector<16x512xf32> to vector<16x128xf32>
    %cst_107 = arith.constant 5.000000e-01 : f32
    %223 = vector.broadcast %cst_107 : f32 to vector<16x128xf32>
    %224 = arith.mulf %223, %222 : vector<16x128xf32>
    %225 = math.tanh %224 : vector<16x128xf32>
    %cst_108 = arith.constant 5.000000e-01 : f32
    %226 = vector.broadcast %cst_108 : f32 to vector<16x128xf32>
    %227 = arith.mulf %226, %225 : vector<16x128xf32>
    %cst_109 = arith.constant 5.000000e-01 : f32
    %228 = vector.broadcast %cst_109 : f32 to vector<16x128xf32>
    %229 = arith.addf %227, %228 : vector<16x128xf32>
    %230 = vector.extract_strided_slice %221 {offsets = [0, 128], sizes = [16, 128], strides = [1, 1]} : vector<16x512xf32> to vector<16x128xf32>
    %cst_110 = arith.constant 5.000000e-01 : f32
    %231 = vector.broadcast %cst_110 : f32 to vector<16x128xf32>
    %232 = arith.mulf %231, %230 : vector<16x128xf32>
    %233 = math.tanh %232 : vector<16x128xf32>
    %cst_111 = arith.constant 5.000000e-01 : f32
    %234 = vector.broadcast %cst_111 : f32 to vector<16x128xf32>
    %235 = arith.mulf %234, %233 : vector<16x128xf32>
    %cst_112 = arith.constant 5.000000e-01 : f32
    %236 = vector.broadcast %cst_112 : f32 to vector<16x128xf32>
    %237 = arith.addf %235, %236 : vector<16x128xf32>
    %238 = vector.extract_strided_slice %221 {offsets = [0, 256], sizes = [16, 128], strides = [1, 1]} : vector<16x512xf32> to vector<16x128xf32>
    %239 = math.tanh %238 : vector<16x128xf32>
    %240 = vector.extract_strided_slice %221 {offsets = [0, 384], sizes = [16, 128], strides = [1, 1]} : vector<16x512xf32> to vector<16x128xf32>
    %cst_113 = arith.constant 5.000000e-01 : f32
    %241 = vector.broadcast %cst_113 : f32 to vector<16x128xf32>
    %242 = arith.mulf %241, %240 : vector<16x128xf32>
    %243 = math.tanh %242 : vector<16x128xf32>
    %cst_114 = arith.constant 5.000000e-01 : f32
    %244 = vector.broadcast %cst_114 : f32 to vector<16x128xf32>
    %245 = arith.mulf %244, %243 : vector<16x128xf32>
    %cst_115 = arith.constant 5.000000e-01 : f32
    %246 = vector.broadcast %cst_115 : f32 to vector<16x128xf32>
    %247 = arith.addf %245, %246 : vector<16x128xf32>
    %c0_116 = arith.constant 0 : index
    %c0_117 = arith.constant 0 : index
    %248 = vector.load %arg8[%c0_116, %c0_117] : memref<16x128xf32, #tpu.memory_space<vmem>>, vector<16x128xf32>
    %249 = arith.mulf %237, %248 : vector<16x128xf32>
    %250 = arith.mulf %229, %239 : vector<16x128xf32>
    %251 = arith.addf %249, %250 : vector<16x128xf32>
    %c0_118 = arith.constant 0 : index
    %c0_119 = arith.constant 0 : index
    %252 = vector.load %arg8[%c0_118, %c0_119] : memref<16x128xf32, #tpu.memory_space<vmem>>, vector<16x128xf32>
    tpu.vector_store %arg8[%c0_118, %c0_119], %251 {strides = array<i32>} : memref<16x128xf32, #tpu.memory_space<vmem>>, vector<16x128xf32>,
    %253 = math.tanh %251 : vector<16x128xf32>
    %254 = arith.mulf %247, %253 : vector<16x128xf32>
    %c0_120 = arith.constant 0 : index
    %c0_121 = arith.constant 0 : index
    %255 = vector.load %arg7[%c0_120, %c0_121] : memref<16x128xf32, #tpu.memory_space<vmem>>, vector<16x128xf32>
    tpu.vector_store %arg7[%c0_120, %c0_121], %254 {strides = array<i32>} : memref<16x128xf32, #tpu.memory_space<vmem>>, vector<16x128xf32>,
    %c6_i32 = arith.constant 6 : i32
    %c0_122 = arith.constant 0 : index
    %c0_123 = arith.constant 0 : index
    %256 = vector.load %arg7[%c0_122, %c0_123] : memref<16x128xf32, #tpu.memory_space<vmem>>, vector<16x128xf32>
    %257 = arith.index_cast %c6_i32 : i32 to index
    %c0_124 = arith.constant 0 : index
    %c0_125 = arith.constant 0 : index
    %258 = vector.load %arg2[%257, %c0_124, %c0_125] : memref<8x16x512xbf16, #tpu.memory_space<vmem>>, vector<1x16x512xbf16>
    %259 = vector.shape_cast %258 : vector<1x16x512xbf16> to vector<16x512xbf16>
    %260 = arith.extf %259 : vector<16x512xbf16> to vector<16x512xf32>
    %261 = arith.truncf %256 : vector<16x128xf32> to vector<16x128xbf16>
    %cst_126 = arith.constant dense<0.000000e+00> : vector<16x512xf32>
    %262 = tpu.matmul %261, %3, %cst_126 {dimension_numbers = #tpu.dot_dimension_numbers<[1], [0], [0], [1], [0, 0, 1, 1], [], []>} : vector<16x128xbf16>, vector<128x512xbf16>, vector<16x512xf32> -> vector<16x512xf32>
    %263 = arith.addf %260, %262 : vector<16x512xf32>
    %264 = vector.extract_strided_slice %263 {offsets = [0, 0], sizes = [16, 128], strides = [1, 1]} : vector<16x512xf32> to vector<16x128xf32>
    %cst_127 = arith.constant 5.000000e-01 : f32
    %265 = vector.broadcast %cst_127 : f32 to vector<16x128xf32>
    %266 = arith.mulf %265, %264 : vector<16x128xf32>
    %267 = math.tanh %266 : vector<16x128xf32>
    %cst_128 = arith.constant 5.000000e-01 : f32
    %268 = vector.broadcast %cst_128 : f32 to vector<16x128xf32>
    %269 = arith.mulf %268, %267 : vector<16x128xf32>
    %cst_129 = arith.constant 5.000000e-01 : f32
    %270 = vector.broadcast %cst_129 : f32 to vector<16x128xf32>
    %271 = arith.addf %269, %270 : vector<16x128xf32>
    %272 = vector.extract_strided_slice %263 {offsets = [0, 128], sizes = [16, 128], strides = [1, 1]} : vector<16x512xf32> to vector<16x128xf32>
    %cst_130 = arith.constant 5.000000e-01 : f32
    %273 = vector.broadcast %cst_130 : f32 to vector<16x128xf32>
    %274 = arith.mulf %273, %272 : vector<16x128xf32>
    %275 = math.tanh %274 : vector<16x128xf32>
    %cst_131 = arith.constant 5.000000e-01 : f32
    %276 = vector.broadcast %cst_131 : f32 to vector<16x128xf32>
    %277 = arith.mulf %276, %275 : vector<16x128xf32>
    %cst_132 = arith.constant 5.000000e-01 : f32
    %278 = vector.broadcast %cst_132 : f32 to vector<16x128xf32>
    %279 = arith.addf %277, %278 : vector<16x128xf32>
    %280 = vector.extract_strided_slice %263 {offsets = [0, 256], sizes = [16, 128], strides = [1, 1]} : vector<16x512xf32> to vector<16x128xf32>
    %281 = math.tanh %280 : vector<16x128xf32>
    %282 = vector.extract_strided_slice %263 {offsets = [0, 384], sizes = [16, 128], strides = [1, 1]} : vector<16x512xf32> to vector<16x128xf32>
    %cst_133 = arith.constant 5.000000e-01 : f32
    %283 = vector.broadcast %cst_133 : f32 to vector<16x128xf32>
    %284 = arith.mulf %283, %282 : vector<16x128xf32>
    %285 = math.tanh %284 : vector<16x128xf32>
    %cst_134 = arith.constant 5.000000e-01 : f32
    %286 = vector.broadcast %cst_134 : f32 to vector<16x128xf32>
    %287 = arith.mulf %286, %285 : vector<16x128xf32>
    %cst_135 = arith.constant 5.000000e-01 : f32
    %288 = vector.broadcast %cst_135 : f32 to vector<16x128xf32>
    %289 = arith.addf %287, %288 : vector<16x128xf32>
    %c0_136 = arith.constant 0 : index
    %c0_137 = arith.constant 0 : index
    %290 = vector.load %arg8[%c0_136, %c0_137] : memref<16x128xf32, #tpu.memory_space<vmem>>, vector<16x128xf32>
    %291 = arith.mulf %279, %290 : vector<16x128xf32>
    %292 = arith.mulf %271, %281 : vector<16x128xf32>
    %293 = arith.addf %291, %292 : vector<16x128xf32>
    %c0_138 = arith.constant 0 : index
    %c0_139 = arith.constant 0 : index
    %294 = vector.load %arg8[%c0_138, %c0_139] : memref<16x128xf32, #tpu.memory_space<vmem>>, vector<16x128xf32>
    tpu.vector_store %arg8[%c0_138, %c0_139], %293 {strides = array<i32>} : memref<16x128xf32, #tpu.memory_space<vmem>>, vector<16x128xf32>,
    %295 = math.tanh %293 : vector<16x128xf32>
    %296 = arith.mulf %289, %295 : vector<16x128xf32>
    %c0_140 = arith.constant 0 : index
    %c0_141 = arith.constant 0 : index
    %297 = vector.load %arg7[%c0_140, %c0_141] : memref<16x128xf32, #tpu.memory_space<vmem>>, vector<16x128xf32>
    tpu.vector_store %arg7[%c0_140, %c0_141], %296 {strides = array<i32>} : memref<16x128xf32, #tpu.memory_space<vmem>>, vector<16x128xf32>,
    %c7_i32 = arith.constant 7 : i32
    %c0_142 = arith.constant 0 : index
    %c0_143 = arith.constant 0 : index
    %298 = vector.load %arg7[%c0_142, %c0_143] : memref<16x128xf32, #tpu.memory_space<vmem>>, vector<16x128xf32>
    %299 = arith.index_cast %c7_i32 : i32 to index
    %c0_144 = arith.constant 0 : index
    %c0_145 = arith.constant 0 : index
    %300 = vector.load %arg2[%299, %c0_144, %c0_145] : memref<8x16x512xbf16, #tpu.memory_space<vmem>>, vector<1x16x512xbf16>
    %301 = vector.shape_cast %300 : vector<1x16x512xbf16> to vector<16x512xbf16>
    %302 = arith.extf %301 : vector<16x512xbf16> to vector<16x512xf32>
    %303 = arith.truncf %298 : vector<16x128xf32> to vector<16x128xbf16>
    %cst_146 = arith.constant dense<0.000000e+00> : vector<16x512xf32>
    %304 = tpu.matmul %303, %3, %cst_146 {dimension_numbers = #tpu.dot_dimension_numbers<[1], [0], [0], [1], [0, 0, 1, 1], [], []>} : vector<16x128xbf16>, vector<128x512xbf16>, vector<16x512xf32> -> vector<16x512xf32>
    %305 = arith.addf %302, %304 : vector<16x512xf32>
    %306 = vector.extract_strided_slice %305 {offsets = [0, 0], sizes = [16, 128], strides = [1, 1]} : vector<16x512xf32> to vector<16x128xf32>
    %cst_147 = arith.constant 5.000000e-01 : f32
    %307 = vector.broadcast %cst_147 : f32 to vector<16x128xf32>
    %308 = arith.mulf %307, %306 : vector<16x128xf32>
    %309 = math.tanh %308 : vector<16x128xf32>
    %cst_148 = arith.constant 5.000000e-01 : f32
    %310 = vector.broadcast %cst_148 : f32 to vector<16x128xf32>
    %311 = arith.mulf %310, %309 : vector<16x128xf32>
    %cst_149 = arith.constant 5.000000e-01 : f32
    %312 = vector.broadcast %cst_149 : f32 to vector<16x128xf32>
    %313 = arith.addf %311, %312 : vector<16x128xf32>
    %314 = vector.extract_strided_slice %305 {offsets = [0, 128], sizes = [16, 128], strides = [1, 1]} : vector<16x512xf32> to vector<16x128xf32>
    %cst_150 = arith.constant 5.000000e-01 : f32
    %315 = vector.broadcast %cst_150 : f32 to vector<16x128xf32>
    %316 = arith.mulf %315, %314 : vector<16x128xf32>
    %317 = math.tanh %316 : vector<16x128xf32>
    %cst_151 = arith.constant 5.000000e-01 : f32
    %318 = vector.broadcast %cst_151 : f32 to vector<16x128xf32>
    %319 = arith.mulf %318, %317 : vector<16x128xf32>
    %cst_152 = arith.constant 5.000000e-01 : f32
    %320 = vector.broadcast %cst_152 : f32 to vector<16x128xf32>
    %321 = arith.addf %319, %320 : vector<16x128xf32>
    %322 = vector.extract_strided_slice %305 {offsets = [0, 256], sizes = [16, 128], strides = [1, 1]} : vector<16x512xf32> to vector<16x128xf32>
    %323 = math.tanh %322 : vector<16x128xf32>
    %324 = vector.extract_strided_slice %305 {offsets = [0, 384], sizes = [16, 128], strides = [1, 1]} : vector<16x512xf32> to vector<16x128xf32>
    %cst_153 = arith.constant 5.000000e-01 : f32
    %325 = vector.broadcast %cst_153 : f32 to vector<16x128xf32>
    %326 = arith.mulf %325, %324 : vector<16x128xf32>
    %327 = math.tanh %326 : vector<16x128xf32>
    %cst_154 = arith.constant 5.000000e-01 : f32
    %328 = vector.broadcast %cst_154 : f32 to vector<16x128xf32>
    %329 = arith.mulf %328, %327 : vector<16x128xf32>
    %cst_155 = arith.constant 5.000000e-01 : f32
    %330 = vector.broadcast %cst_155 : f32 to vector<16x128xf32>
    %331 = arith.addf %329, %330 : vector<16x128xf32>
    %c0_156 = arith.constant 0 : index
    %c0_157 = arith.constant 0 : index
    %332 = vector.load %arg8[%c0_156, %c0_157] : memref<16x128xf32, #tpu.memory_space<vmem>>, vector<16x128xf32>
    %333 = arith.mulf %321, %332 : vector<16x128xf32>
    %334 = arith.mulf %313, %323 : vector<16x128xf32>
    %335 = arith.addf %333, %334 : vector<16x128xf32>
    %c0_158 = arith.constant 0 : index
    %c0_159 = arith.constant 0 : index
    %336 = vector.load %arg8[%c0_158, %c0_159] : memref<16x128xf32, #tpu.memory_space<vmem>>, vector<16x128xf32>
    tpu.vector_store %arg8[%c0_158, %c0_159], %335 {strides = array<i32>} : memref<16x128xf32, #tpu.memory_space<vmem>>, vector<16x128xf32>,
    %337 = math.tanh %335 : vector<16x128xf32>
    %338 = arith.mulf %331, %337 : vector<16x128xf32>
    %c0_160 = arith.constant 0 : index
    %c0_161 = arith.constant 0 : index
    %339 = vector.load %arg7[%c0_160, %c0_161] : memref<16x128xf32, #tpu.memory_space<vmem>>, vector<16x128xf32>
    tpu.vector_store %arg7[%c0_160, %c0_161], %338 {strides = array<i32>} : memref<16x128xf32, #tpu.memory_space<vmem>>, vector<16x128xf32>,
    %c8_i32 = arith.constant 8 : i32
    %c0_i32_162 = arith.constant 0 : i32
    %340 = arith.cmpi eq, %arg1, %c0_i32_162 : i32
    %341 = arith.extui %340 : i1 to i32
    %c0_i32_163 = arith.constant 0 : i32
    %342 = arith.cmpi ne, %341, %c0_i32_163 : i32
    scf.if %342 {
      %c0_164 = arith.constant 0 : index
      %c0_165 = arith.constant 0 : index
      %343 = vector.load %arg7[%c0_164, %c0_165] : memref<16x128xf32, #tpu.memory_space<vmem>>, vector<16x128xf32>
      %344 = arith.truncf %343 : vector<16x128xf32> to vector<16x128xbf16>
      %c0_166 = arith.constant 0 : index
      %c0_167 = arith.constant 0 : index
      %345 = vector.load %arg4[%c0_166, %c0_167] : memref<128x128xbf16, #tpu.memory_space<vmem>>, vector<128x128xbf16>
      %cst_168 = arith.constant dense<0.000000e+00> : vector<16x128xf32>
      %346 = tpu.matmul %344, %345, %cst_168 {dimension_numbers = #tpu.dot_dimension_numbers<[1], [0], [0], [1], [0, 0, 1, 1], [], []>} : vector<16x128xbf16>, vector<128x128xbf16>, vector<16x128xf32> -> vector<16x128xf32>
      %c0_169 = arith.constant 0 : index
      %c0_170 = arith.constant 0 : index
      %347 = vector.load %arg5[%c0_169, %c0_170] : memref<1x128xf32, #tpu.memory_space<vmem>>, vector<1x128xf32>
      %348 = vector.broadcast %347 : vector<1x128xf32> to vector<16x128xf32>
      %349 = arith.addf %346, %348 : vector<16x128xf32>
      %c0_171 = arith.constant 0 : index
      %c0_172 = arith.constant 0 : index
      %350 = vector.load %arg6[%c0_171, %c0_172] : memref<16x128xf32, #tpu.memory_space<vmem>>, vector<16x128xf32>
      tpu.vector_store %arg6[%c0_171, %c0_172], %349 {strides = array<i32>} : memref<16x128xf32, #tpu.memory_space<vmem>>, vector<16x128xf32>,
    } else {
    }
    return
  }
  func.func @transform_0(%arg0: i32, %arg1: i32) -> (i32, i32, i32) {
    %c0_i32 = arith.constant 0 : i32
    %c0_i32_0 = arith.constant 0 : i32
    return %arg1, %arg0, %c0_i32 : i32, i32, i32
  }
  func.func @transform_1(%arg0: i32, %arg1: i32) -> (i32, i32) {
    %c0_i32 = arith.constant 0 : i32
    %c0_i32_0 = arith.constant 0 : i32
    %c0_i32_1 = arith.constant 0 : i32
    return %c0_i32, %c0_i32_0 : i32, i32
  }
  func.func @transform_2(%arg0: i32, %arg1: i32) -> (i32, i32) {
    %c0_i32 = arith.constant 0 : i32
    %c0_i32_0 = arith.constant 0 : i32
    %c0_i32_1 = arith.constant 0 : i32
    return %c0_i32, %c0_i32_0 : i32, i32
  }
  func.func @transform_3(%arg0: i32, %arg1: i32) -> (i32, i32) {
    %c0_i32 = arith.constant 0 : i32
    %c0_i32_0 = arith.constant 0 : i32
    %c0_i32_1 = arith.constant 0 : i32
    return %c0_i32, %c0_i32_0 : i32, i32
  }
  func.func @transform_4(%arg0: i32, %arg1: i32) -> (i32, i32) {
    %c0_i32 = arith.constant 0 : i32
    %c0_i32_0 = arith.constant 0 : i32
    return %arg0, %c0_i32 : i32, i32
  }
}

</mosaic_0001>

<llo_original>
// kernel: tpu_custom_call.1
$region0: #{tpu_custom_call.1}
  #allocation0 [shape = 'u32[]', space=smem, size = 0x4, offset = 0x4, fixed_abs, tag = 'smem constant byte address 0x4 - core index']
  #allocation1 [shape = 'u32[72,128]{1,0:T(1,128)}', space=vmem, size = 0x9000, scoped, tag = 'internal scratch']
  #allocation2 [shape = 'f32[16,128]{1,0:T(8,128)}', space=vmem, size = 0x2000, scoped, tag = 'scratch operand']
  #allocation3 [shape = 'f32[16,128]{1,0:T(8,128)}', space=vmem, size = 0x2000, scoped, tag = 'scratch operand']
  %s0 = inlined_call_operand.hbm [shape: bf16[8,16,512], index: 0, kind: input, shape index: {}]
  %s1 = inlined_call_operand.hbm [shape: bf16[128,512], index: 1, kind: input, shape index: {}]
  %s2 = inlined_call_operand.hbm [shape: bf16[128,128], index: 2, kind: input, shape index: {}]
  %s3 = inlined_call_operand.vmem [shape: f32[1,128], index: 3, kind: input, shape index: {}]
  %s4 = inlined_call_operand.hbm [shape: f32[16,128], index: 4, kind: output, shape index: {}]
  %s5 = sld [smem:[#allocation0]]
  $region46: #{tpu_custom_call.1} parent=0
    _
  %s7 = ssub.s32 1, %s5
  %s8 = scalar_select 0, %s7, %s5
  $region1: #{tpu_custom_call.1} parent=0
    #allocation4 [shape = 'u8[131072]{0}', space=vmem, size = 0x20000, scoped, tag = 'input window, operand 0, single buffered']
    #allocation5 [shape = 's32[1]{0}', space=sflag, size = 0x4, scoped, tag = 'scoped memory for tpu_custom_call.1']
    #allocation6 [shape = 's32[1]{0}', space=sflag, size = 0x4, scoped, tag = 'scoped memory for tpu_custom_call.1']
    #allocation7 [shape = 'u8[131072]{0}', space=vmem, size = 0x20000, scoped, tag = 'input window, operand 1, single buffered']
    #allocation8 [shape = 's32[1]{0}', space=sflag, size = 0x4, scoped, tag = 'scoped memory for tpu_custom_call.1']
    #allocation9 [shape = 'u8[32768]{0}', space=vmem, size = 0x8000, scoped, tag = 'input window, operand 2, single buffered']
    #allocation10 [shape = 'u8[8192]{0}', space=vmem, size = 0x2000, scoped, tag = 'output window, operand 0, single buffered']
    %9 = vsyncpa [#allocation5], 0
    %10 = vsyncpa [#allocation8], 0
    %11 = vsyncpa [#allocation6], 0
    // Predicated region
    $region2: #{tpu_custom_call.1} parent=1 // pred_check
      _
    $region3: #{tpu_custom_call.1} parent=1 // pred_check_branch
      %13 = sbr.rel (0) target = $region5
    $region4: #{tpu_custom_call.1} parent=1 // pred_region
      %15 = vsyncadd [#allocation5], 0
      %s16 = sshll.u32 %s0, 4
      %s17 = int_to_ptr.hbm [resolvable:$true] %s16
      %s18 = sshll.u32 [#allocation4], 4
      %s19 = int_to_ptr.vmem [resolvable:$true] %s18
      %24 = dma.hbm_to_vmem [thread:$0]  %s17, 4096, %s19, [#allocation5], 256, 256, 16
    $region5: #{tpu_custom_call.1} parent=1 // pred_fallthru
      _
    // Predicated region
    $region6: #{tpu_custom_call.1} parent=1 // pred_check
      _
    $region7: #{tpu_custom_call.1} parent=1 // pred_check_branch
      %26 = sbr.rel (0) target = $region9
    $region8: #{tpu_custom_call.1} parent=1 // pred_region
      %28 = vsyncadd [#allocation8], 0
      %s29 = sshll.u32 %s1, 4
      %s30 = int_to_ptr.hbm [resolvable:$true] %s29
      %s31 = sshll.u32 [#allocation7], 4
      %s32 = int_to_ptr.vmem [resolvable:$true] %s31
      %37 = dma.hbm_to_vmem [thread:$0]  %s30, 4096, %s32, [#allocation8], 256, 256, 16
    $region9: #{tpu_custom_call.1} parent=1 // pred_fallthru
      _
    // Predicated region
    $region10: #{tpu_custom_call.1} parent=1 // pred_check
      _
    $region11: #{tpu_custom_call.1} parent=1 // pred_check_branch
      %39 = sbr.rel (0) target = $region13
    $region12: #{tpu_custom_call.1} parent=1 // pred_region
      %41 = vsyncadd [#allocation8], 0
      %s42 = sshll.u32 %s2, 4
      %s43 = int_to_ptr.hbm [resolvable:$true] %s42
      %s44 = sshll.u32 [#allocation9], 4
      %s45 = int_to_ptr.vmem [resolvable:$true] %s44
      %50 = dma.hbm_to_vmem [thread:$0]  %s43, 1024, %s45, [#allocation8], 64, 64, 4
    $region13: #{tpu_custom_call.1} parent=1 // pred_fallthru
      _
    // Predicated region
    $region14: #{tpu_custom_call.1} parent=1 // pred_check
      _
    $region15: #{tpu_custom_call.1} parent=1 // pred_check_branch
      %52 = sbr.rel (0) target = $region17
    $region16: #{tpu_custom_call.1} parent=1 // pred_region
      _
    $region17: #{tpu_custom_call.1} parent=1 // pred_fallthru
      _
    // Predicated region
    $region18: #{tpu_custom_call.1} parent=1 // pred_check
      _
    $region19: #{tpu_custom_call.1} parent=1 // pred_check_branch
      %54 = sbr.rel (0) target = $region21
    $region20: #{tpu_custom_call.1} parent=1 // pred_region
      %56 = dma.done [#allocation5], 4096
    $region21: #{tpu_custom_call.1} parent=1 // pred_fallthru
      _
    // Predicated region
    $region22: #{tpu_custom_call.1} parent=1 // pred_check
      _
    $region23: #{tpu_custom_call.1} parent=1 // pred_check_branch
      %58 = sbr.rel (0) target = $region25
    $region24: #{tpu_custom_call.1} parent=1 // pred_region
      %60 = dma.done [#allocation8], 4096
    $region25: #{tpu_custom_call.1} parent=1 // pred_fallthru
      _
    // Predicated region
    $region26: #{tpu_custom_call.1} parent=1 // pred_check
      _
    $region27: #{tpu_custom_call.1} parent=1 // pred_check_branch
      %62 = sbr.rel (0) target = $region29
    $region28: #{tpu_custom_call.1} parent=1 // pred_region
      %64 = dma.done [#allocation8], 1024
    $region29: #{tpu_custom_call.1} parent=1 // pred_fallthru
      _
    %p65 = scmp.eq.s32.totalorder 0, 0
    // Predicated region
    $region30: #{tpu_custom_call.1} parent=1 // pred_check
      %p66 = pneg %p65
    $region31: #{tpu_custom_call.1} parent=1 // pred_check_branch
      %68 = sbr.rel (%p66) target = $region33
    $region32: #{tpu_custom_call.1} parent=1 // pred_region
      %69 = vst [vmem:[#allocation2] sm:$0xff] 0.0
      %70 = vst [vmem:[#allocation2 + $0x8] sm:$0xff] 0.0
      %71 = vst [vmem:[#allocation3] sm:$0xff] 0.0
      %72 = vst [vmem:[#allocation3 + $0x8] sm:$0xff] 0.0
    $region33: #{tpu_custom_call.1} parent=1 // pred_fallthru
      _
    %v73 = vld [vmem:[#allocation7] sm:$0xff]
    %v74 = vld [vmem:[#allocation7 + $0x8] sm:$0xff]
    %v75 = vld [vmem:[#allocation7 + $0x10] sm:$0xff]
    %v76 = vld [vmem:[#allocation7 + $0x18] sm:$0xff]
    %v77 = vld [vmem:[#allocation7 + $0x20] sm:$0xff]
    %v78 = vld [vmem:[#allocation7 + $0x28] sm:$0xff]
    %v79 = vld [vmem:[#allocation7 + $0x30] sm:$0xff]
    %v80 = vld [vmem:[#allocation7 + $0x38] sm:$0xff]
    %v81 = vld [vmem:[#allocation7 + $0x40] sm:$0xff]
    %v82 = vld [vmem:[#allocation7 + $0x48] sm:$0xff]
    %v83 = vld [vmem:[#allocation7 + $0x50] sm:$0xff]
    %v84 = vld [vmem:[#allocation7 + $0x58] sm:$0xff]
    %v85 = vld [vmem:[#allocation7 + $0x60] sm:$0xff]
    %v86 = vld [vmem:[#allocation7 + $0x68] sm:$0xff]
    %v87 = vld [vmem:[#allocation7 + $0x70] sm:$0xff]
    %v88 = vld [vmem:[#allocation7 + $0x78] sm:$0xff]
    %v89 = vld [vmem:[#allocation7 + $0x80] sm:$0xff]
    %v90 = vld [vmem:[#allocation7 + $0x88] sm:$0xff]
    %v91 = vld [vmem:[#allocation7 + $0x90] sm:$0xff]
    %v92 = vld [vmem:[#allocation7 + $0x98] sm:$0xff]
    %v93 = vld [vmem:[#allocation7 + $0xa0] sm:$0xff]
    %v94 = vld [vmem:[#allocation7 + $0xa8] sm:$0xff]
    %v95 = vld [vmem:[#allocation7 + $0xb0] sm:$0xff]
    %v96 = vld [vmem:[#allocation7 + $0xb8] sm:$0xff]
    %v97 = vld [vmem:[#allocation7 + $0xc0] sm:$0xff]
    %v98 = vld [vmem:[#allocation7 + $0xc8] sm:$0xff]
    %v99 = vld [vmem:[#allocation7 + $0xd0] sm:$0xff]
    %v100 = vld [vmem:[#allocation7 + $0xd8] sm:$0xff]
    %v101 = vld [vmem:[#allocation7 + $0xe0] sm:$0xff]
    %v102 = vld [vmem:[#allocation7 + $0xe8] sm:$0xff]
    %v103 = vld [vmem:[#allocation7 + $0xf0] sm:$0xff]
    %v104 = vld [vmem:[#allocation7 + $0xf8] sm:$0xff]
    %v105 = vld [vmem:[#allocation2] sm:$0xff]
    %v106 = vld [vmem:[#allocation2 + $0x8] sm:$0xff]
    %v107 = vld [vmem:[#allocation4] sm:$0xff]
    %v108 = vld [vmem:[#allocation4 + $0x8] sm:$0xff]
    %v109 = vld [vmem:[#allocation4 + $0x10] sm:$0xff]
    %v110 = vld [vmem:[#allocation4 + $0x18] sm:$0xff]
    %v111 = vunpack.c.l.bf16 %v107
    %v112 = vunpack.c.h.bf16 %v107
    %v113 = vunpack.c.l.bf16 %v108
    %v114 = vunpack.c.h.bf16 %v108
    %v115 = vunpack.c.l.bf16 %v109
    %v116 = vunpack.c.h.bf16 %v109
    %v117 = vunpack.c.l.bf16 %v110
    %v118 = vunpack.c.h.bf16 %v110
    %v119 = vpack.c.bf16 %v106, %v105
    %v152 = vunpack.c.l.b16 %v73
    %v153 = vunpack.c.h.b16 %v73
    %v154 = vunpack.c.l.b16 %v74
    %v155 = vunpack.c.h.b16 %v74
    %v156 = vunpack.c.l.b16 %v75
    %v157 = vunpack.c.h.b16 %v75
    %v158 = vunpack.c.l.b16 %v76
    %v159 = vunpack.c.h.b16 %v76
    %v160 = vunpack.c.l.b16 %v77
    %v161 = vunpack.c.h.b16 %v77
    %v162 = vunpack.c.l.b16 %v78
    %v163 = vunpack.c.h.b16 %v78
    %v164 = vunpack.c.l.b16 %v79
    %v165 = vunpack.c.h.b16 %v79
    %v166 = vunpack.c.l.b16 %v80
    %v167 = vunpack.c.h.b16 %v80
    %v168 = vunpack.c.l.b16 %v81
    %v169 = vunpack.c.h.b16 %v81
    %v170 = vunpack.c.l.b16 %v82
    %v171 = vunpack.c.h.b16 %v82
    %v172 = vunpack.c.l.b16 %v83
    %v173 = vunpack.c.h.b16 %v83
    %v174 = vunpack.c.l.b16 %v84
    %v175 = vunpack.c.h.b16 %v84
    %v176 = vunpack.c.l.b16 %v85
    %v177 = vunpack.c.h.b16 %v85
    %v178 = vunpack.c.l.b16 %v86
    %v179 = vunpack.c.h.b16 %v86
    %v180 = vunpack.c.l.b16 %v87
    %v181 = vunpack.c.h.b16 %v87
    %v182 = vunpack.c.l.b16 %v88
    %v183 = vunpack.c.h.b16 %v88
    %v184 = vunpack.c.l.b16 %v89
    %v185 = vunpack.c.h.b16 %v89
    %v186 = vunpack.c.l.b16 %v90
    %v187 = vunpack.c.h.b16 %v90
    %v188 = vunpack.c.l.b16 %v91
    %v189 = vunpack.c.h.b16 %v91
    %v190 = vunpack.c.l.b16 %v92
    %v191 = vunpack.c.h.b16 %v92
    %v192 = vunpack.c.l.b16 %v93
    %v193 = vunpack.c.h.b16 %v93
    %v194 = vunpack.c.l.b16 %v94
    %v195 = vunpack.c.h.b16 %v94
    %v196 = vunpack.c.l.b16 %v95
    %v197 = vunpack.c.h.b16 %v95
    %v198 = vunpack.c.l.b16 %v96
    %v199 = vunpack.c.h.b16 %v96
    %v200 = vunpack.c.l.b16 %v97
    %v201 = vunpack.c.h.b16 %v97
    %v202 = vunpack.c.l.b16 %v98
    %v203 = vunpack.c.h.b16 %v98
    %v204 = vunpack.c.l.b16 %v99
    %v205 = vunpack.c.h.b16 %v99
    %v206 = vunpack.c.l.b16 %v100
    %v207 = vunpack.c.h.b16 %v100
    %v208 = vunpack.c.l.b16 %v101
    %v209 = vunpack.c.h.b16 %v101
    %v210 = vunpack.c.l.b16 %v102
    %v211 = vunpack.c.h.b16 %v102
    %v212 = vunpack.c.l.b16 %v103
    %v213 = vunpack.c.h.b16 %v103
    %v214 = vunpack.c.l.b16 %v104
    %v215 = vunpack.c.h.b16 %v104
    %v216 = vpack.c.b16 %v156, %v152
    %v217 = vpack.c.b16 %v157, %v153
    %v218 = vpack.c.b16 %v158, %v154
    %v219 = vpack.c.b16 %v159, %v155
    %v220 = vpack.c.b16 %v164, %v160
    %v221 = vpack.c.b16 %v165, %v161
    %v222 = vpack.c.b16 %v166, %v162
    %v223 = vpack.c.b16 %v167, %v163
    %v224 = vpack.c.b16 %v172, %v168
    %v225 = vpack.c.b16 %v173, %v169
    %v226 = vpack.c.b16 %v174, %v170
    %v227 = vpack.c.b16 %v175, %v171
    %v228 = vpack.c.b16 %v180, %v176
    %v229 = vpack.c.b16 %v181, %v177
    %v230 = vpack.c.b16 %v182, %v178
    %v231 = vpack.c.b16 %v183, %v179
    %v232 = vpack.c.b16 %v188, %v184
    %v233 = vpack.c.b16 %v189, %v185
    %v234 = vpack.c.b16 %v190, %v186
    %v235 = vpack.c.b16 %v191, %v187
    %v236 = vpack.c.b16 %v196, %v192
    %v237 = vpack.c.b16 %v197, %v193
    %v238 = vpack.c.b16 %v198, %v194
    %v239 = vpack.c.b16 %v199, %v195
    %v240 = vpack.c.b16 %v204, %v200
    %v241 = vpack.c.b16 %v205, %v201
    %v242 = vpack.c.b16 %v206, %v202
    %v243 = vpack.c.b16 %v207, %v203
    %v244 = vpack.c.b16 %v212, %v208
    %v245 = vpack.c.b16 %v213, %v209
    %v246 = vpack.c.b16 %v214, %v210
    %v247 = vpack.c.b16 %v215, %v211
    %280 = vmatpush.bf16.msra.mxu0 %v244
    %281 = vmatpush.bf16.msra.mxu0 %v240
    %282 = vmatpush.bf16.msra.mxu0 %v236
    %283 = vmatpush.bf16.msra.mxu0 %v232
    %284 = vmatpush.bf16.msra.mxu0 %v228
    %285 = vmatpush.bf16.msra.mxu0 %v224
    %286 = vmatpush.bf16.msra.mxu0 %v220
    %287 = vmatpush.bf16.msra.mxu0 %v216
    %288 = vmatmul.bf16.gmra.mxu0 %v119
    %v289 = vpop.f32.mrf.mxu0
    %v290 = vadd.f32 0.0, %v289
    %v291 = vpop.f32.mrf.mxu0
    %v292 = vadd.f32 0.0, %v291
    %293 = vdwg.mxu0
    %294 = vmatpush.bf16.msra.mxu0 %v245
    %295 = vmatpush.bf16.msra.mxu0 %v241
    %296 = vmatpush.bf16.msra.mxu0 %v237
    %297 = vmatpush.bf16.msra.mxu0 %v233
    %298 = vmatpush.bf16.msra.mxu0 %v229
    %299 = vmatpush.bf16.msra.mxu0 %v225
    %300 = vmatpush.bf16.msra.mxu0 %v221
    %301 = vmatpush.bf16.msra.mxu0 %v217
    %302 = vmatmul.bf16.gmra.mxu0 %v119
    %v303 = vpop.f32.mrf.mxu0
    %v304 = vadd.f32 0.0, %v303
    %v305 = vpop.f32.mrf.mxu0
    %v306 = vadd.f32 0.0, %v305
    %307 = vdwg.mxu0
    %308 = vmatpush.bf16.msra.mxu0 %v246
    %309 = vmatpush.bf16.msra.mxu0 %v242
    %310 = vmatpush.bf16.msra.mxu0 %v238
    %311 = vmatpush.bf16.msra.mxu0 %v234
    %312 = vmatpush.bf16.msra.mxu0 %v230
    %313 = vmatpush.bf16.msra.mxu0 %v226
    %314 = vmatpush.bf16.msra.mxu0 %v222
    %315 = vmatpush.bf16.msra.mxu0 %v218
    %316 = vmatmul.bf16.gmra.mxu0 %v119
    %v317 = vpop.f32.mrf.mxu0
    %v318 = vadd.f32 0.0, %v317
    %v319 = vpop.f32.mrf.mxu0
    %v320 = vadd.f32 0.0, %v319
    %321 = vdwg.mxu0
    %322 = vmatpush.bf16.msra.mxu0 %v247
    %323 = vmatpush.bf16.msra.mxu0 %v243
    %324 = vmatpush.bf16.msra.mxu0 %v239
    %325 = vmatpush.bf16.msra.mxu0 %v235
    %326 = vmatpush.bf16.msra.mxu0 %v231
    %327 = vmatpush.bf16.msra.mxu0 %v227
    %328 = vmatpush.bf16.msra.mxu0 %v223
    %329 = vmatpush.bf16.msra.mxu0 %v219
    %330 = vmatmul.bf16.gmra.mxu0 %v119
    %v331 = vpop.f32.mrf.mxu0
    %v332 = vadd.f32 0.0, %v331
    %v333 = vpop.f32.mrf.mxu0
    %v334 = vadd.f32 0.0, %v333
    %335 = vdwg.mxu0
    %v336 = vadd.f32 %v111, %v290
    %v337 = vadd.f32 %v112, %v304
    %v338 = vadd.f32 %v113, %v318
    %v339 = vadd.f32 %v114, %v332
    %v340 = vadd.f32 %v115, %v292
    %v341 = vadd.f32 %v116, %v306
    %v342 = vadd.f32 %v117, %v320
    %v343 = vadd.f32 %v118, %v334
    %v344 = vmul.f32 %v336, 0.5
    %v345 = vmul.f32 %v340, 0.5
    %v346 = vtanh.pop %v344
    %v347 = vtanh.pop %v345
    %v348 = vmul.f32 %v346, 0.5
    %v349 = vmul.f32 %v347, 0.5
    %v350 = vadd.f32 %v348, 0.5
    %v351 = vadd.f32 %v349, 0.5
    %v352 = vmul.f32 %v337, 0.5
    %v353 = vmul.f32 %v341, 0.5
    %v354 = vtanh.pop %v352
    %v355 = vtanh.pop %v353
    %v356 = vmul.f32 %v354, 0.5
    %v357 = vmul.f32 %v355, 0.5
    %v358 = vadd.f32 %v356, 0.5
    %v359 = vadd.f32 %v357, 0.5
    %v360 = vtanh.pop %v338
    %v361 = vtanh.pop %v342
    %v362 = vmul.f32 %v339, 0.5
    %v363 = vmul.f32 %v343, 0.5
    %v364 = vtanh.pop %v362
    %v365 = vtanh.pop %v363
    %v366 = vmul.f32 %v364, 0.5
    %v367 = vmul.f32 %v365, 0.5
    %v368 = vadd.f32 %v366, 0.5
    %v369 = vadd.f32 %v367, 0.5
    %v370 = vld [vmem:[#allocation3] sm:$0xff]
    %v371 = vld [vmem:[#allocation3 + $0x8] sm:$0xff]
    %v372 = vmul.f32 %v358, %v370
    %v373 = vmul.f32 %v359, %v371
    %v374 = vmul.f32 %v350, %v360
    %v375 = vmul.f32 %v351, %v361
    %v376 = vadd.f32 %v372, %v374
    %v377 = vadd.f32 %v373, %v375
    %378 = vst [vmem:[#allocation3] sm:$0xff] %v376
    %379 = vst [vmem:[#allocation3 + $0x8] sm:$0xff] %v377
    %v380 = vtanh.pop %v376
    %v381 = vtanh.pop %v377
    %v382 = vmul.f32 %v368, %v380
    %v383 = vmul.f32 %v369, %v381
    %384 = vst [vmem:[#allocation2] sm:$0xff] %v382
    %385 = vst [vmem:[#allocation2 + $0x8] sm:$0xff] %v383
    %v386 = vld [vmem:[#allocation2] sm:$0xff]
    %v387 = vld [vmem:[#allocation2 + $0x8] sm:$0xff]
    %s388 = scalar_lea.vmem [#allocation4], 32
    %v389 = vld [vmem:[%s388] sm:$0xff]
    %v390 = vld [vmem:[%s388 + $0x8] sm:$0xff]
    %v391 = vld [vmem:[%s388 + $0x10] sm:$0xff]
    %v392 = vld [vmem:[%s388 + $0x18] sm:$0xff]
    %v393 = vunpack.c.l.bf16 %v389
    %v394 = vunpack.c.h.bf16 %v389
    %v395 = vunpack.c.l.bf16 %v390
    %v396 = vunpack.c.h.bf16 %v390
    %v397 = vunpack.c.l.bf16 %v391
    %v398 = vunpack.c.h.bf16 %v391
    %v399 = vunpack.c.l.bf16 %v392
    %v400 = vunpack.c.h.bf16 %v392
    %v401 = vpack.c.bf16 %v387, %v386
    %402 = vmatpush.bf16.msra.mxu0 %v244
    %403 = vmatpush.bf16.msra.mxu0 %v240
    %404 = vmatpush.bf16.msra.mxu0 %v236
    %405 = vmatpush.bf16.msra.mxu0 %v232
    %406 = vmatpush.bf16.msra.mxu0 %v228
    %407 = vmatpush.bf16.msra.mxu0 %v224
    %408 = vmatpush.bf16.msra.mxu0 %v220
    %409 = vmatpush.bf16.msra.mxu0 %v216
    %410 = vmatmul.bf16.gmra.mxu0 %v401
    %v411 = vpop.f32.mrf.mxu0
    %v412 = vadd.f32 0.0, %v411
    %v413 = vpop.f32.mrf.mxu0
    %v414 = vadd.f32 0.0, %v413
    %415 = vdwg.mxu0
    %416 = vmatpush.bf16.msra.mxu0 %v245
    %417 = vmatpush.bf16.msra.mxu0 %v241
    %418 = vmatpush.bf16.msra.mxu0 %v237
    %419 = vmatpush.bf16.msra.mxu0 %v233
    %420 = vmatpush.bf16.msra.mxu0 %v229
    %421 = vmatpush.bf16.msra.mxu0 %v225
    %422 = vmatpush.bf16.msra.mxu0 %v221
    %423 = vmatpush.bf16.msra.mxu0 %v217
    %424 = vmatmul.bf16.gmra.mxu0 %v401
    %v425 = vpop.f32.mrf.mxu0
    %v426 = vadd.f32 0.0, %v425
    %v427 = vpop.f32.mrf.mxu0
    %v428 = vadd.f32 0.0, %v427
    %429 = vdwg.mxu0
    %430 = vmatpush.bf16.msra.mxu0 %v246
    %431 = vmatpush.bf16.msra.mxu0 %v242
    %432 = vmatpush.bf16.msra.mxu0 %v238
    %433 = vmatpush.bf16.msra.mxu0 %v234
    %434 = vmatpush.bf16.msra.mxu0 %v230
    %435 = vmatpush.bf16.msra.mxu0 %v226
    %436 = vmatpush.bf16.msra.mxu0 %v222
    %437 = vmatpush.bf16.msra.mxu0 %v218
    %438 = vmatmul.bf16.gmra.mxu0 %v401
    %v439 = vpop.f32.mrf.mxu0
    %v440 = vadd.f32 0.0, %v439
    %v441 = vpop.f32.mrf.mxu0
    %v442 = vadd.f32 0.0, %v441
    %443 = vdwg.mxu0
    %444 = vmatpush.bf16.msra.mxu0 %v247
    %445 = vmatpush.bf16.msra.mxu0 %v243
    %446 = vmatpush.bf16.msra.mxu0 %v239
    %447 = vmatpush.bf16.msra.mxu0 %v235
    %448 = vmatpush.bf16.msra.mxu0 %v231
    %449 = vmatpush.bf16.msra.mxu0 %v227
    %450 = vmatpush.bf16.msra.mxu0 %v223
    %451 = vmatpush.bf16.msra.mxu0 %v219
    %452 = vmatmul.bf16.gmra.mxu0 %v401
    %v453 = vpop.f32.mrf.mxu0
    %v454 = vadd.f32 0.0, %v453
    %v455 = vpop.f32.mrf.mxu0
    %v456 = vadd.f32 0.0, %v455
    %457 = vdwg.mxu0
    %v458 = vadd.f32 %v393, %v412
    %v459 = vadd.f32 %v394, %v426
    %v460 = vadd.f32 %v395, %v440
    %v461 = vadd.f32 %v396, %v454
    %v462 = vadd.f32 %v397, %v414
    %v463 = vadd.f32 %v398, %v428
    %v464 = vadd.f32 %v399, %v442
    %v465 = vadd.f32 %v400, %v456
    %v466 = vmul.f32 %v458, 0.5
    %v467 = vmul.f32 %v462, 0.5
    %v468 = vtanh.pop %v466
    %v469 = vtanh.pop %v467
    %v470 = vmul.f32 %v468, 0.5
    %v471 = vmul.f32 %v469, 0.5
    %v472 = vadd.f32 %v470, 0.5
    %v473 = vadd.f32 %v471, 0.5
    %v474 = vmul.f32 %v459, 0.5
    %v475 = vmul.f32 %v463, 0.5
    %v476 = vtanh.pop %v474
    %v477 = vtanh.pop %v475
    %v478 = vmul.f32 %v476, 0.5
    %v479 = vmul.f32 %v477, 0.5
    %v480 = vadd.f32 %v478, 0.5
    %v481 = vadd.f32 %v479, 0.5
    %v482 = vtanh.pop %v460
    %v483 = vtanh.pop %v464
    %v484 = vmul.f32 %v461, 0.5
    %v485 = vmul.f32 %v465, 0.5
    %v486 = vtanh.pop %v484
    %v487 = vtanh.pop %v485
    %v488 = vmul.f32 %v486, 0.5
    %v489 = vmul.f32 %v487, 0.5
    %v490 = vadd.f32 %v488, 0.5
    %v491 = vadd.f32 %v489, 0.5
    %v492 = vld [vmem:[#allocation3] sm:$0xff]
    %v493 = vld [vmem:[#allocation3 + $0x8] sm:$0xff]
    %v494 = vmul.f32 %v480, %v492
    %v495 = vmul.f32 %v481, %v493
    %v496 = vmul.f32 %v472, %v482
    %v497 = vmul.f32 %v473, %v483
    %v498 = vadd.f32 %v494, %v496
    %v499 = vadd.f32 %v495, %v497
    %500 = vst [vmem:[#allocation3] sm:$0xff] %v498
    %501 = vst [vmem:[#allocation3 + $0x8] sm:$0xff] %v499
    %v502 = vtanh.pop %v498
    %v503 = vtanh.pop %v499
    %v504 = vmul.f32 %v490, %v502
    %v505 = vmul.f32 %v491, %v503
    %506 = vst [vmem:[#allocation2] sm:$0xff] %v504
    %507 = vst [vmem:[#allocation2 + $0x8] sm:$0xff] %v505
    %v508 = vld [vmem:[#allocation2] sm:$0xff]
    %v509 = vld [vmem:[#allocation2 + $0x8] sm:$0xff]
    %s510 = scalar_lea.vmem [#allocation4], 64
    %v511 = vld [vmem:[%s510] sm:$0xff]
    %v512 = vld [vmem:[%s510 + $0x8] sm:$0xff]
    %v513 = vld [vmem:[%s510 + $0x10] sm:$0xff]
    %v514 = vld [vmem:[%s510 + $0x18] sm:$0xff]
    %v515 = vunpack.c.l.bf16 %v511
    %v516 = vunpack.c.h.bf16 %v511
    %v517 = vunpack.c.l.bf16 %v512
    %v518 = vunpack.c.h.bf16 %v512
    %v519 = vunpack.c.l.bf16 %v513
    %v520 = vunpack.c.h.bf16 %v513
    %v521 = vunpack.c.l.bf16 %v514
    %v522 = vunpack.c.h.bf16 %v514
    %v523 = vpack.c.bf16 %v509, %v508
    %524 = vmatpush.bf16.msra.mxu0 %v244
    %525 = vmatpush.bf16.msra.mxu0 %v240
    %526 = vmatpush.bf16.msra.mxu0 %v236
    %527 = vmatpush.bf16.msra.mxu0 %v232
    %528 = vmatpush.bf16.msra.mxu0 %v228
    %529 = vmatpush.bf16.msra.mxu0 %v224
    %530 = vmatpush.bf16.msra.mxu0 %v220
    %531 = vmatpush.bf16.msra.mxu0 %v216
    %532 = vmatmul.bf16.gmra.mxu0 %v523
    %v533 = vpop.f32.mrf.mxu0
    %v534 = vadd.f32 0.0, %v533
    %v535 = vpop.f32.mrf.mxu0
    %v536 = vadd.f32 0.0, %v535
    %537 = vdwg.mxu0
    %538 = vmatpush.bf16.msra.mxu0 %v245
    %539 = vmatpush.bf16.msra.mxu0 %v241
    %540 = vmatpush.bf16.msra.mxu0 %v237
    %541 = vmatpush.bf16.msra.mxu0 %v233
    %542 = vmatpush.bf16.msra.mxu0 %v229
    %543 = vmatpush.bf16.msra.mxu0 %v225
    %544 = vmatpush.bf16.msra.mxu0 %v221
    %545 = vmatpush.bf16.msra.mxu0 %v217
    %546 = vmatmul.bf16.gmra.mxu0 %v523
    %v547 = vpop.f32.mrf.mxu0
    %v548 = vadd.f32 0.0, %v547
    %v549 = vpop.f32.mrf.mxu0
    %v550 = vadd.f32 0.0, %v549
    %551 = vdwg.mxu0
    %552 = vmatpush.bf16.msra.mxu0 %v246
    %553 = vmatpush.bf16.msra.mxu0 %v242
    %554 = vmatpush.bf16.msra.mxu0 %v238
    %555 = vmatpush.bf16.msra.mxu0 %v234
    %556 = vmatpush.bf16.msra.mxu0 %v230
    %557 = vmatpush.bf16.msra.mxu0 %v226
    %558 = vmatpush.bf16.msra.mxu0 %v222
    %559 = vmatpush.bf16.msra.mxu0 %v218
    %560 = vmatmul.bf16.gmra.mxu0 %v523
    %v561 = vpop.f32.mrf.mxu0
    %v562 = vadd.f32 0.0, %v561
    %v563 = vpop.f32.mrf.mxu0
    %v564 = vadd.f32 0.0, %v563
    %565 = vdwg.mxu0
    %566 = vmatpush.bf16.msra.mxu0 %v247
    %567 = vmatpush.bf16.msra.mxu0 %v243
    %568 = vmatpush.bf16.msra.mxu0 %v239
    %569 = vmatpush.bf16.msra.mxu0 %v235
    %570 = vmatpush.bf16.msra.mxu0 %v231
    %571 = vmatpush.bf16.msra.mxu0 %v227
    %572 = vmatpush.bf16.msra.mxu0 %v223
    %573 = vmatpush.bf16.msra.mxu0 %v219
    %574 = vmatmul.bf16.gmra.mxu0 %v523
    %v575 = vpop.f32.mrf.mxu0
    %v576 = vadd.f32 0.0, %v575
    %v577 = vpop.f32.mrf.mxu0
    %v578 = vadd.f32 0.0, %v577
    %579 = vdwg.mxu0
    %v580 = vadd.f32 %v515, %v534
    %v581 = vadd.f32 %v516, %v548
    %v582 = vadd.f32 %v517, %v562
    %v583 = vadd.f32 %v518, %v576
    %v584 = vadd.f32 %v519, %v536
    %v585 = vadd.f32 %v520, %v550
    %v586 = vadd.f32 %v521, %v564
    %v587 = vadd.f32 %v522, %v578
    %v588 = vmul.f32 %v580, 0.5
    %v589 = vmul.f32 %v584, 0.5
    %v590 = vtanh.pop %v588
    %v591 = vtanh.pop %v589
    %v592 = vmul.f32 %v590, 0.5
    %v593 = vmul.f32 %v591, 0.5
    %v594 = vadd.f32 %v592, 0.5
    %v595 = vadd.f32 %v593, 0.5
    %v596 = vmul.f32 %v581, 0.5
    %v597 = vmul.f32 %v585, 0.5
    %v598 = vtanh.pop %v596
    %v599 = vtanh.pop %v597
    %v600 = vmul.f32 %v598, 0.5
    %v601 = vmul.f32 %v599, 0.5
    %v602 = vadd.f32 %v600, 0.5
    %v603 = vadd.f32 %v601, 0.5
    %v604 = vtanh.pop %v582
    %v605 = vtanh.pop %v586
    %v606 = vmul.f32 %v583, 0.5
    %v607 = vmul.f32 %v587, 0.5
    %v608 = vtanh.pop %v606
    %v609 = vtanh.pop %v607
    %v610 = vmul.f32 %v608, 0.5
    %v611 = vmul.f32 %v609, 0.5
    %v612 = vadd.f32 %v610, 0.5
    %v613 = vadd.f32 %v611, 0.5
    %v614 = vld [vmem:[#allocation3] sm:$0xff]
    %v615 = vld [vmem:[#allocation3 + $0x8] sm:$0xff]
    %v616 = vmul.f32 %v602, %v614
    %v617 = vmul.f32 %v603, %v615
    %v618 = vmul.f32 %v594, %v604
    %v619 = vmul.f32 %v595, %v605
    %v620 = vadd.f32 %v616, %v618
    %v621 = vadd.f32 %v617, %v619
    %622 = vst [vmem:[#allocation3] sm:$0xff] %v620
    %623 = vst [vmem:[#allocation3 + $0x8] sm:$0xff] %v621
    %v624 = vtanh.pop %v620
    %v625 = vtanh.pop %v621
    %v626 = vmul.f32 %v612, %v624
    %v627 = vmul.f32 %v613, %v625
    %628 = vst [vmem:[#allocation2] sm:$0xff] %v626
    %629 = vst [vmem:[#allocation2 + $0x8] sm:$0xff] %v627
    %v630 = vld [vmem:[#allocation2] sm:$0xff]
    %v631 = vld [vmem:[#allocation2 + $0x8] sm:$0xff]
    %s632 = scalar_lea.vmem [#allocation4], 96
    %v633 = vld [vmem:[%s632] sm:$0xff]
    %v634 = vld [vmem:[%s632 + $0x8] sm:$0xff]
    %v635 = vld [vmem:[%s632 + $0x10] sm:$0xff]
    %v636 = vld [vmem:[%s632 + $0x18] sm:$0xff]
    %v637 = vunpack.c.l.bf16 %v633
    %v638 = vunpack.c.h.bf16 %v633
    %v639 = vunpack.c.l.bf16 %v634
    %v640 = vunpack.c.h.bf16 %v634
    %v641 = vunpack.c.l.bf16 %v635
    %v642 = vunpack.c.h.bf16 %v635
    %v643 = vunpack.c.l.bf16 %v636
    %v644 = vunpack.c.h.bf16 %v636
    %v645 = vpack.c.bf16 %v631, %v630
    %646 = vmatpush.bf16.msra.mxu0 %v244
    %647 = vmatpush.bf16.msra.mxu0 %v240
    %648 = vmatpush.bf16.msra.mxu0 %v236
    %649 = vmatpush.bf16.msra.mxu0 %v232
    %650 = vmatpush.bf16.msra.mxu0 %v228
    %651 = vmatpush.bf16.msra.mxu0 %v224
    %652 = vmatpush.bf16.msra.mxu0 %v220
    %653 = vmatpush.bf16.msra.mxu0 %v216
    %654 = vmatmul.bf16.gmra.mxu0 %v645
    %v655 = vpop.f32.mrf.mxu0
    %v656 = vadd.f32 0.0, %v655
    %v657 = vpop.f32.mrf.mxu0
    %v658 = vadd.f32 0.0, %v657
    %659 = vdwg.mxu0
    %660 = vmatpush.bf16.msra.mxu0 %v245
    %661 = vmatpush.bf16.msra.mxu0 %v241
    %662 = vmatpush.bf16.msra.mxu0 %v237
    %663 = vmatpush.bf16.msra.mxu0 %v233
    %664 = vmatpush.bf16.msra.mxu0 %v229
    %665 = vmatpush.bf16.msra.mxu0 %v225
    %666 = vmatpush.bf16.msra.mxu0 %v221
    %667 = vmatpush.bf16.msra.mxu0 %v217
    %668 = vmatmul.bf16.gmra.mxu0 %v645
    %v669 = vpop.f32.mrf.mxu0
    %v670 = vadd.f32 0.0, %v669
    %v671 = vpop.f32.mrf.mxu0
    %v672 = vadd.f32 0.0, %v671
    %673 = vdwg.mxu0
    %674 = vmatpush.bf16.msra.mxu0 %v246
    %675 = vmatpush.bf16.msra.mxu0 %v242
    %676 = vmatpush.bf16.msra.mxu0 %v238
    %677 = vmatpush.bf16.msra.mxu0 %v234
    %678 = vmatpush.bf16.msra.mxu0 %v230
    %679 = vmatpush.bf16.msra.mxu0 %v226
    %680 = vmatpush.bf16.msra.mxu0 %v222
    %681 = vmatpush.bf16.msra.mxu0 %v218
    %682 = vmatmul.bf16.gmra.mxu0 %v645
    %v683 = vpop.f32.mrf.mxu0
    %v684 = vadd.f32 0.0, %v683
    %v685 = vpop.f32.mrf.mxu0
    %v686 = vadd.f32 0.0, %v685
    %687 = vdwg.mxu0
    %688 = vmatpush.bf16.msra.mxu0 %v247
    %689 = vmatpush.bf16.msra.mxu0 %v243
    %690 = vmatpush.bf16.msra.mxu0 %v239
    %691 = vmatpush.bf16.msra.mxu0 %v235
    %692 = vmatpush.bf16.msra.mxu0 %v231
    %693 = vmatpush.bf16.msra.mxu0 %v227
    %694 = vmatpush.bf16.msra.mxu0 %v223
    %695 = vmatpush.bf16.msra.mxu0 %v219
    %696 = vmatmul.bf16.gmra.mxu0 %v645
    %v697 = vpop.f32.mrf.mxu0
    %v698 = vadd.f32 0.0, %v697
    %v699 = vpop.f32.mrf.mxu0
    %v700 = vadd.f32 0.0, %v699
    %701 = vdwg.mxu0
    %v702 = vadd.f32 %v637, %v656
    %v703 = vadd.f32 %v638, %v670
    %v704 = vadd.f32 %v639, %v684
    %v705 = vadd.f32 %v640, %v698
    %v706 = vadd.f32 %v641, %v658
    %v707 = vadd.f32 %v642, %v672
    %v708 = vadd.f32 %v643, %v686
    %v709 = vadd.f32 %v644, %v700
    %v710 = vmul.f32 %v702, 0.5
    %v711 = vmul.f32 %v706, 0.5
    %v712 = vtanh.pop %v710
    %v713 = vtanh.pop %v711
    %v714 = vmul.f32 %v712, 0.5
    %v715 = vmul.f32 %v713, 0.5
    %v716 = vadd.f32 %v714, 0.5
    %v717 = vadd.f32 %v715, 0.5
    %v718 = vmul.f32 %v703, 0.5
    %v719 = vmul.f32 %v707, 0.5
    %v720 = vtanh.pop %v718
    %v721 = vtanh.pop %v719
    %v722 = vmul.f32 %v720, 0.5
    %v723 = vmul.f32 %v721, 0.5
    %v724 = vadd.f32 %v722, 0.5
    %v725 = vadd.f32 %v723, 0.5
    %v726 = vtanh.pop %v704
    %v727 = vtanh.pop %v708
    %v728 = vmul.f32 %v705, 0.5
    %v729 = vmul.f32 %v709, 0.5
    %v730 = vtanh.pop %v728
    %v731 = vtanh.pop %v729
    %v732 = vmul.f32 %v730, 0.5
    %v733 = vmul.f32 %v731, 0.5
    %v734 = vadd.f32 %v732, 0.5
    %v735 = vadd.f32 %v733, 0.5
    %v736 = vld [vmem:[#allocation3] sm:$0xff]
    %v737 = vld [vmem:[#allocation3 + $0x8] sm:$0xff]
    %v738 = vmul.f32 %v724, %v736
    %v739 = vmul.f32 %v725, %v737
    %v740 = vmul.f32 %v716, %v726
    %v741 = vmul.f32 %v717, %v727
    %v742 = vadd.f32 %v738, %v740
    %v743 = vadd.f32 %v739, %v741
    %744 = vst [vmem:[#allocation3] sm:$0xff] %v742
    %745 = vst [vmem:[#allocation3 + $0x8] sm:$0xff] %v743
    %v746 = vtanh.pop %v742
    %v747 = vtanh.pop %v743
    %v748 = vmul.f32 %v734, %v746
    %v749 = vmul.f32 %v735, %v747
    %750 = vst [vmem:[#allocation2] sm:$0xff] %v748
    %751 = vst [vmem:[#allocation2 + $0x8] sm:$0xff] %v749
    %v752 = vld [vmem:[#allocation2] sm:$0xff]
    %v753 = vld [vmem:[#allocation2 + $0x8] sm:$0xff]
    %s754 = scalar_lea.vmem [#allocation4], 128
    %v755 = vld [vmem:[%s754] sm:$0xff]
    %v756 = vld [vmem:[%s754 + $0x8] sm:$0xff]
    %v757 = vld [vmem:[%s754 + $0x10] sm:$0xff]
    %v758 = vld [vmem:[%s754 + $0x18] sm:$0xff]
    %v759 = vunpack.c.l.bf16 %v755
    %v760 = vunpack.c.h.bf16 %v755
    %v761 = vunpack.c.l.bf16 %v756
    %v762 = vunpack.c.h.bf16 %v756
    %v763 = vunpack.c.l.bf16 %v757
    %v764 = vunpack.c.h.bf16 %v757
    %v765 = vunpack.c.l.bf16 %v758
    %v766 = vunpack.c.h.bf16 %v758
    %v767 = vpack.c.bf16 %v753, %v752
    %768 = vmatpush.bf16.msra.mxu0 %v244
    %769 = vmatpush.bf16.msra.mxu0 %v240
    %770 = vmatpush.bf16.msra.mxu0 %v236
    %771 = vmatpush.bf16.msra.mxu0 %v232
    %772 = vmatpush.bf16.msra.mxu0 %v228
    %773 = vmatpush.bf16.msra.mxu0 %v224
    %774 = vmatpush.bf16.msra.mxu0 %v220
    %775 = vmatpush.bf16.msra.mxu0 %v216
    %776 = vmatmul.bf16.gmra.mxu0 %v767
    %v777 = vpop.f32.mrf.mxu0
    %v778 = vadd.f32 0.0, %v777
    %v779 = vpop.f32.mrf.mxu0
    %v780 = vadd.f32 0.0, %v779
    %781 = vdwg.mxu0
    %782 = vmatpush.bf16.msra.mxu0 %v245
    %783 = vmatpush.bf16.msra.mxu0 %v241
    %784 = vmatpush.bf16.msra.mxu0 %v237
    %785 = vmatpush.bf16.msra.mxu0 %v233
    %786 = vmatpush.bf16.msra.mxu0 %v229
    %787 = vmatpush.bf16.msra.mxu0 %v225
    %788 = vmatpush.bf16.msra.mxu0 %v221
    %789 = vmatpush.bf16.msra.mxu0 %v217
    %790 = vmatmul.bf16.gmra.mxu0 %v767
    %v791 = vpop.f32.mrf.mxu0
    %v792 = vadd.f32 0.0, %v791
    %v793 = vpop.f32.mrf.mxu0
    %v794 = vadd.f32 0.0, %v793
    %795 = vdwg.mxu0
    %796 = vmatpush.bf16.msra.mxu0 %v246
    %797 = vmatpush.bf16.msra.mxu0 %v242
    %798 = vmatpush.bf16.msra.mxu0 %v238
    %799 = vmatpush.bf16.msra.mxu0 %v234
    %800 = vmatpush.bf16.msra.mxu0 %v230
    %801 = vmatpush.bf16.msra.mxu0 %v226
    %802 = vmatpush.bf16.msra.mxu0 %v222
    %803 = vmatpush.bf16.msra.mxu0 %v218
    %804 = vmatmul.bf16.gmra.mxu0 %v767
    %v805 = vpop.f32.mrf.mxu0
    %v806 = vadd.f32 0.0, %v805
    %v807 = vpop.f32.mrf.mxu0
    %v808 = vadd.f32 0.0, %v807
    %809 = vdwg.mxu0
    %810 = vmatpush.bf16.msra.mxu0 %v247
    %811 = vmatpush.bf16.msra.mxu0 %v243
    %812 = vmatpush.bf16.msra.mxu0 %v239
    %813 = vmatpush.bf16.msra.mxu0 %v235
    %814 = vmatpush.bf16.msra.mxu0 %v231
    %815 = vmatpush.bf16.msra.mxu0 %v227
    %816 = vmatpush.bf16.msra.mxu0 %v223
    %817 = vmatpush.bf16.msra.mxu0 %v219
    %818 = vmatmul.bf16.gmra.mxu0 %v767
    %v819 = vpop.f32.mrf.mxu0
    %v820 = vadd.f32 0.0, %v819
    %v821 = vpop.f32.mrf.mxu0
    %v822 = vadd.f32 0.0, %v821
    %823 = vdwg.mxu0
    %v824 = vadd.f32 %v759, %v778
    %v825 = vadd.f32 %v760, %v792
    %v826 = vadd.f32 %v761, %v806
    %v827 = vadd.f32 %v762, %v820
    %v828 = vadd.f32 %v763, %v780
    %v829 = vadd.f32 %v764, %v794
    %v830 = vadd.f32 %v765, %v808
    %v831 = vadd.f32 %v766, %v822
    %v832 = vmul.f32 %v824, 0.5
    %v833 = vmul.f32 %v828, 0.5
    %v834 = vtanh.pop %v832
    %v835 = vtanh.pop %v833
    %v836 = vmul.f32 %v834, 0.5
    %v837 = vmul.f32 %v835, 0.5
    %v838 = vadd.f32 %v836, 0.5
    %v839 = vadd.f32 %v837, 0.5
    %v840 = vmul.f32 %v825, 0.5
    %v841 = vmul.f32 %v829, 0.5
    %v842 = vtanh.pop %v840
    %v843 = vtanh.pop %v841
    %v844 = vmul.f32 %v842, 0.5
    %v845 = vmul.f32 %v843, 0.5
    %v846 = vadd.f32 %v844, 0.5
    %v847 = vadd.f32 %v845, 0.5
    %v848 = vtanh.pop %v826
    %v849 = vtanh.pop %v830
    %v850 = vmul.f32 %v827, 0.5
    %v851 = vmul.f32 %v831, 0.5
    %v852 = vtanh.pop %v850
    %v853 = vtanh.pop %v851
    %v854 = vmul.f32 %v852, 0.5
    %v855 = vmul.f32 %v853, 0.5
    %v856 = vadd.f32 %v854, 0.5
    %v857 = vadd.f32 %v855, 0.5
    %v858 = vld [vmem:[#allocation3] sm:$0xff]
    %v859 = vld [vmem:[#allocation3 + $0x8] sm:$0xff]
    %v860 = vmul.f32 %v846, %v858
    %v861 = vmul.f32 %v847, %v859
    %v862 = vmul.f32 %v838, %v848
    %v863 = vmul.f32 %v839, %v849
    %v864 = vadd.f32 %v860, %v862
    %v865 = vadd.f32 %v861, %v863
    %866 = vst [vmem:[#allocation3] sm:$0xff] %v864
    %867 = vst [vmem:[#allocation3 + $0x8] sm:$0xff] %v865
    %v868 = vtanh.pop %v864
    %v869 = vtanh.pop %v865
    %v870 = vmul.f32 %v856, %v868
    %v871 = vmul.f32 %v857, %v869
    %872 = vst [vmem:[#allocation2] sm:$0xff] %v870
    %873 = vst [vmem:[#allocation2 + $0x8] sm:$0xff] %v871
    %v874 = vld [vmem:[#allocation2] sm:$0xff]
    %v875 = vld [vmem:[#allocation2 + $0x8] sm:$0xff]
    %s876 = scalar_lea.vmem [#allocation4], 160
    %v877 = vld [vmem:[%s876] sm:$0xff]
    %v878 = vld [vmem:[%s876 + $0x8] sm:$0xff]
    %v879 = vld [vmem:[%s876 + $0x10] sm:$0xff]
    %v880 = vld [vmem:[%s876 + $0x18] sm:$0xff]
    %v881 = vunpack.c.l.bf16 %v877
    %v882 = vunpack.c.h.bf16 %v877
    %v883 = vunpack.c.l.bf16 %v878
    %v884 = vunpack.c.h.bf16 %v878
    %v885 = vunpack.c.l.bf16 %v879
    %v886 = vunpack.c.h.bf16 %v879
    %v887 = vunpack.c.l.bf16 %v880
    %v888 = vunpack.c.h.bf16 %v880
    %v889 = vpack.c.bf16 %v875, %v874
    %890 = vmatpush.bf16.msra.mxu0 %v244
    %891 = vmatpush.bf16.msra.mxu0 %v240
    %892 = vmatpush.bf16.msra.mxu0 %v236
    %893 = vmatpush.bf16.msra.mxu0 %v232
    %894 = vmatpush.bf16.msra.mxu0 %v228
    %895 = vmatpush.bf16.msra.mxu0 %v224
    %896 = vmatpush.bf16.msra.mxu0 %v220
    %897 = vmatpush.bf16.msra.mxu0 %v216
    %898 = vmatmul.bf16.gmra.mxu0 %v889
    %v899 = vpop.f32.mrf.mxu0
    %v900 = vadd.f32 0.0, %v899
    %v901 = vpop.f32.mrf.mxu0
    %v902 = vadd.f32 0.0, %v901
    %903 = vdwg.mxu0
    %904 = vmatpush.bf16.msra.mxu0 %v245
    %905 = vmatpush.bf16.msra.mxu0 %v241
    %906 = vmatpush.bf16.msra.mxu0 %v237
    %907 = vmatpush.bf16.msra.mxu0 %v233
    %908 = vmatpush.bf16.msra.mxu0 %v229
    %909 = vmatpush.bf16.msra.mxu0 %v225
    %910 = vmatpush.bf16.msra.mxu0 %v221
    %911 = vmatpush.bf16.msra.mxu0 %v217
    %912 = vmatmul.bf16.gmra.mxu0 %v889
    %v913 = vpop.f32.mrf.mxu0
    %v914 = vadd.f32 0.0, %v913
    %v915 = vpop.f32.mrf.mxu0
    %v916 = vadd.f32 0.0, %v915
    %917 = vdwg.mxu0
    %918 = vmatpush.bf16.msra.mxu0 %v246
    %919 = vmatpush.bf16.msra.mxu0 %v242
    %920 = vmatpush.bf16.msra.mxu0 %v238
    %921 = vmatpush.bf16.msra.mxu0 %v234
    %922 = vmatpush.bf16.msra.mxu0 %v230
    %923 = vmatpush.bf16.msra.mxu0 %v226
    %924 = vmatpush.bf16.msra.mxu0 %v222
    %925 = vmatpush.bf16.msra.mxu0 %v218
    %926 = vmatmul.bf16.gmra.mxu0 %v889
    %v927 = vpop.f32.mrf.mxu0
    %v928 = vadd.f32 0.0, %v927
    %v929 = vpop.f32.mrf.mxu0
    %v930 = vadd.f32 0.0, %v929
    %931 = vdwg.mxu0
    %932 = vmatpush.bf16.msra.mxu0 %v247
    %933 = vmatpush.bf16.msra.mxu0 %v243
    %934 = vmatpush.bf16.msra.mxu0 %v239
    %935 = vmatpush.bf16.msra.mxu0 %v235
    %936 = vmatpush.bf16.msra.mxu0 %v231
    %937 = vmatpush.bf16.msra.mxu0 %v227
    %938 = vmatpush.bf16.msra.mxu0 %v223
    %939 = vmatpush.bf16.msra.mxu0 %v219
    %940 = vmatmul.bf16.gmra.mxu0 %v889
    %v941 = vpop.f32.mrf.mxu0
    %v942 = vadd.f32 0.0, %v941
    %v943 = vpop.f32.mrf.mxu0
    %v944 = vadd.f32 0.0, %v943
    %945 = vdwg.mxu0
    %v946 = vadd.f32 %v881, %v900
    %v947 = vadd.f32 %v882, %v914
    %v948 = vadd.f32 %v883, %v928
    %v949 = vadd.f32 %v884, %v942
    %v950 = vadd.f32 %v885, %v902
    %v951 = vadd.f32 %v886, %v916
    %v952 = vadd.f32 %v887, %v930
    %v953 = vadd.f32 %v888, %v944
    %v954 = vmul.f32 %v946, 0.5
    %v955 = vmul.f32 %v950, 0.5
    %v956 = vtanh.pop %v954
    %v957 = vtanh.pop %v955
    %v958 = vmul.f32 %v956, 0.5
    %v959 = vmul.f32 %v957, 0.5
    %v960 = vadd.f32 %v958, 0.5
    %v961 = vadd.f32 %v959, 0.5
    %v962 = vmul.f32 %v947, 0.5
    %v963 = vmul.f32 %v951, 0.5
    %v964 = vtanh.pop %v962
    %v965 = vtanh.pop %v963
    %v966 = vmul.f32 %v964, 0.5
    %v967 = vmul.f32 %v965, 0.5
    %v968 = vadd.f32 %v966, 0.5
    %v969 = vadd.f32 %v967, 0.5
    %v970 = vtanh.pop %v948
    %v971 = vtanh.pop %v952
    %v972 = vmul.f32 %v949, 0.5
    %v973 = vmul.f32 %v953, 0.5
    %v974 = vtanh.pop %v972
    %v975 = vtanh.pop %v973
    %v976 = vmul.f32 %v974, 0.5
    %v977 = vmul.f32 %v975, 0.5
    %v978 = vadd.f32 %v976, 0.5
    %v979 = vadd.f32 %v977, 0.5
    %v980 = vld [vmem:[#allocation3] sm:$0xff]
    %v981 = vld [vmem:[#allocation3 + $0x8] sm:$0xff]
    %v982 = vmul.f32 %v968, %v980
    %v983 = vmul.f32 %v969, %v981
    %v984 = vmul.f32 %v960, %v970
    %v985 = vmul.f32 %v961, %v971
    %v986 = vadd.f32 %v982, %v984
    %v987 = vadd.f32 %v983, %v985
    %988 = vst [vmem:[#allocation3] sm:$0xff] %v986
    %989 = vst [vmem:[#allocation3 + $0x8] sm:$0xff] %v987
    %v990 = vtanh.pop %v986
    %v991 = vtanh.pop %v987
    %v992 = vmul.f32 %v978, %v990
    %v993 = vmul.f32 %v979, %v991
    %994 = vst [vmem:[#allocation2] sm:$0xff] %v992
    %995 = vst [vmem:[#allocation2 + $0x8] sm:$0xff] %v993
    %v996 = vld [vmem:[#allocation2] sm:$0xff]
    %v997 = vld [vmem:[#allocation2 + $0x8] sm:$0xff]
    %s998 = scalar_lea.vmem [#allocation4], 192
    %v999 = vld [vmem:[%s998] sm:$0xff]
    %v1000 = vld [vmem:[%s998 + $0x8] sm:$0xff]
    %v1001 = vld [vmem:[%s998 + $0x10] sm:$0xff]
    %v1002 = vld [vmem:[%s998 + $0x18] sm:$0xff]
    %v1003 = vunpack.c.l.bf16 %v999
    %v1004 = vunpack.c.h.bf16 %v999
    %v1005 = vunpack.c.l.bf16 %v1000
    %v1006 = vunpack.c.h.bf16 %v1000
    %v1007 = vunpack.c.l.bf16 %v1001
    %v1008 = vunpack.c.h.bf16 %v1001
    %v1009 = vunpack.c.l.bf16 %v1002
    %v1010 = vunpack.c.h.bf16 %v1002
    %v1011 = vpack.c.bf16 %v997, %v996
    %1012 = vmatpush.bf16.msra.mxu0 %v244
    %1013 = vmatpush.bf16.msra.mxu0 %v240
    %1014 = vmatpush.bf16.msra.mxu0 %v236
    %1015 = vmatpush.bf16.msra.mxu0 %v232
    %1016 = vmatpush.bf16.msra.mxu0 %v228
    %1017 = vmatpush.bf16.msra.mxu0 %v224
    %1018 = vmatpush.bf16.msra.mxu0 %v220
    %1019 = vmatpush.bf16.msra.mxu0 %v216
    %1020 = vmatmul.bf16.gmra.mxu0 %v1011
    %v1021 = vpop.f32.mrf.mxu0
    %v1022 = vadd.f32 0.0, %v1021
    %v1023 = vpop.f32.mrf.mxu0
    %v1024 = vadd.f32 0.0, %v1023
    %1025 = vdwg.mxu0
    %1026 = vmatpush.bf16.msra.mxu0 %v245
    %1027 = vmatpush.bf16.msra.mxu0 %v241
    %1028 = vmatpush.bf16.msra.mxu0 %v237
    %1029 = vmatpush.bf16.msra.mxu0 %v233
    %1030 = vmatpush.bf16.msra.mxu0 %v229
    %1031 = vmatpush.bf16.msra.mxu0 %v225
    %1032 = vmatpush.bf16.msra.mxu0 %v221
    %1033 = vmatpush.bf16.msra.mxu0 %v217
    %1034 = vmatmul.bf16.gmra.mxu0 %v1011
    %v1035 = vpop.f32.mrf.mxu0
    %v1036 = vadd.f32 0.0, %v1035
    %v1037 = vpop.f32.mrf.mxu0
    %v1038 = vadd.f32 0.0, %v1037
    %1039 = vdwg.mxu0
    %1040 = vmatpush.bf16.msra.mxu0 %v246
    %1041 = vmatpush.bf16.msra.mxu0 %v242
    %1042 = vmatpush.bf16.msra.mxu0 %v238
    %1043 = vmatpush.bf16.msra.mxu0 %v234
    %1044 = vmatpush.bf16.msra.mxu0 %v230
    %1045 = vmatpush.bf16.msra.mxu0 %v226
    %1046 = vmatpush.bf16.msra.mxu0 %v222
    %1047 = vmatpush.bf16.msra.mxu0 %v218
    %1048 = vmatmul.bf16.gmra.mxu0 %v1011
    %v1049 = vpop.f32.mrf.mxu0
    %v1050 = vadd.f32 0.0, %v1049
    %v1051 = vpop.f32.mrf.mxu0
    %v1052 = vadd.f32 0.0, %v1051
    %1053 = vdwg.mxu0
    %1054 = vmatpush.bf16.msra.mxu0 %v247
    %1055 = vmatpush.bf16.msra.mxu0 %v243
    %1056 = vmatpush.bf16.msra.mxu0 %v239
    %1057 = vmatpush.bf16.msra.mxu0 %v235
    %1058 = vmatpush.bf16.msra.mxu0 %v231
    %1059 = vmatpush.bf16.msra.mxu0 %v227
    %1060 = vmatpush.bf16.msra.mxu0 %v223
    %1061 = vmatpush.bf16.msra.mxu0 %v219
    %1062 = vmatmul.bf16.gmra.mxu0 %v1011
    %v1063 = vpop.f32.mrf.mxu0
    %v1064 = vadd.f32 0.0, %v1063
    %v1065 = vpop.f32.mrf.mxu0
    %v1066 = vadd.f32 0.0, %v1065
    %1067 = vdwg.mxu0
    %v1068 = vadd.f32 %v1003, %v1022
    %v1069 = vadd.f32 %v1004, %v1036
    %v1070 = vadd.f32 %v1005, %v1050
    %v1071 = vadd.f32 %v1006, %v1064
    %v1072 = vadd.f32 %v1007, %v1024
    %v1073 = vadd.f32 %v1008, %v1038
    %v1074 = vadd.f32 %v1009, %v1052
    %v1075 = vadd.f32 %v1010, %v1066
    %v1076 = vmul.f32 %v1068, 0.5
    %v1077 = vmul.f32 %v1072, 0.5
    %v1078 = vtanh.pop %v1076
    %v1079 = vtanh.pop %v1077
    %v1080 = vmul.f32 %v1078, 0.5
    %v1081 = vmul.f32 %v1079, 0.5
    %v1082 = vadd.f32 %v1080, 0.5
    %v1083 = vadd.f32 %v1081, 0.5
    %v1084 = vmul.f32 %v1069, 0.5
    %v1085 = vmul.f32 %v1073, 0.5
    %v1086 = vtanh.pop %v1084
    %v1087 = vtanh.pop %v1085
    %v1088 = vmul.f32 %v1086, 0.5
    %v1089 = vmul.f32 %v1087, 0.5
    %v1090 = vadd.f32 %v1088, 0.5
    %v1091 = vadd.f32 %v1089, 0.5
    %v1092 = vtanh.pop %v1070
    %v1093 = vtanh.pop %v1074
    %v1094 = vmul.f32 %v1071, 0.5
    %v1095 = vmul.f32 %v1075, 0.5
    %v1096 = vtanh.pop %v1094
    %v1097 = vtanh.pop %v1095
    %v1098 = vmul.f32 %v1096, 0.5
    %v1099 = vmul.f32 %v1097, 0.5
    %v1100 = vadd.f32 %v1098, 0.5
    %v1101 = vadd.f32 %v1099, 0.5
    %v1102 = vld [vmem:[#allocation3] sm:$0xff]
    %v1103 = vld [vmem:[#allocation3 + $0x8] sm:$0xff]
    %v1104 = vmul.f32 %v1090, %v1102
    %v1105 = vmul.f32 %v1091, %v1103
    %v1106 = vmul.f32 %v1082, %v1092
    %v1107 = vmul.f32 %v1083, %v1093
    %v1108 = vadd.f32 %v1104, %v1106
    %v1109 = vadd.f32 %v1105, %v1107
    %1110 = vst [vmem:[#allocation3] sm:$0xff] %v1108
    %1111 = vst [vmem:[#allocation3 + $0x8] sm:$0xff] %v1109
    %v1112 = vtanh.pop %v1108
    %v1113 = vtanh.pop %v1109
    %v1114 = vmul.f32 %v1100, %v1112
    %v1115 = vmul.f32 %v1101, %v1113
    %1116 = vst [vmem:[#allocation2] sm:$0xff] %v1114
    %1117 = vst [vmem:[#allocation2 + $0x8] sm:$0xff] %v1115
    %v1118 = vld [vmem:[#allocation2] sm:$0xff]
    %v1119 = vld [vmem:[#allocation2 + $0x8] sm:$0xff]
    %s1120 = scalar_lea.vmem [#allocation4], 224
    %v1121 = vld [vmem:[%s1120] sm:$0xff]
    %v1122 = vld [vmem:[%s1120 + $0x8] sm:$0xff]
    %v1123 = vld [vmem:[%s1120 + $0x10] sm:$0xff]
    %v1124 = vld [vmem:[%s1120 + $0x18] sm:$0xff]
    %v1125 = vunpack.c.l.bf16 %v1121
    %v1126 = vunpack.c.h.bf16 %v1121
    %v1127 = vunpack.c.l.bf16 %v1122
    %v1128 = vunpack.c.h.bf16 %v1122
    %v1129 = vunpack.c.l.bf16 %v1123
    %v1130 = vunpack.c.h.bf16 %v1123
    %v1131 = vunpack.c.l.bf16 %v1124
    %v1132 = vunpack.c.h.bf16 %v1124
    %v1133 = vpack.c.bf16 %v1119, %v1118
    %1134 = vmatpush.bf16.msra.mxu0 %v244
    %1135 = vmatpush.bf16.msra.mxu0 %v240
    %1136 = vmatpush.bf16.msra.mxu0 %v236
    %1137 = vmatpush.bf16.msra.mxu0 %v232
    %1138 = vmatpush.bf16.msra.mxu0 %v228
    %1139 = vmatpush.bf16.msra.mxu0 %v224
    %1140 = vmatpush.bf16.msra.mxu0 %v220
    %1141 = vmatpush.bf16.msra.mxu0 %v216
    %1142 = vmatmul.bf16.gmra.mxu0 %v1133
    %v1143 = vpop.f32.mrf.mxu0
    %v1144 = vadd.f32 0.0, %v1143
    %v1145 = vpop.f32.mrf.mxu0
    %v1146 = vadd.f32 0.0, %v1145
    %1147 = vdwg.mxu0
    %1148 = vmatpush.bf16.msra.mxu0 %v245
    %1149 = vmatpush.bf16.msra.mxu0 %v241
    %1150 = vmatpush.bf16.msra.mxu0 %v237
    %1151 = vmatpush.bf16.msra.mxu0 %v233
    %1152 = vmatpush.bf16.msra.mxu0 %v229
    %1153 = vmatpush.bf16.msra.mxu0 %v225
    %1154 = vmatpush.bf16.msra.mxu0 %v221
    %1155 = vmatpush.bf16.msra.mxu0 %v217
    %1156 = vmatmul.bf16.gmra.mxu0 %v1133
    %v1157 = vpop.f32.mrf.mxu0
    %v1158 = vadd.f32 0.0, %v1157
    %v1159 = vpop.f32.mrf.mxu0
    %v1160 = vadd.f32 0.0, %v1159
    %1161 = vdwg.mxu0
    %1162 = vmatpush.bf16.msra.mxu0 %v246
    %1163 = vmatpush.bf16.msra.mxu0 %v242
    %1164 = vmatpush.bf16.msra.mxu0 %v238
    %1165 = vmatpush.bf16.msra.mxu0 %v234
    %1166 = vmatpush.bf16.msra.mxu0 %v230
    %1167 = vmatpush.bf16.msra.mxu0 %v226
    %1168 = vmatpush.bf16.msra.mxu0 %v222
    %1169 = vmatpush.bf16.msra.mxu0 %v218
    %1170 = vmatmul.bf16.gmra.mxu0 %v1133
    %v1171 = vpop.f32.mrf.mxu0
    %v1172 = vadd.f32 0.0, %v1171
    %v1173 = vpop.f32.mrf.mxu0
    %v1174 = vadd.f32 0.0, %v1173
    %1175 = vdwg.mxu0
    %1176 = vmatpush.bf16.msra.mxu0 %v247
    %1177 = vmatpush.bf16.msra.mxu0 %v243
    %1178 = vmatpush.bf16.msra.mxu0 %v239
    %1179 = vmatpush.bf16.msra.mxu0 %v235
    %1180 = vmatpush.bf16.msra.mxu0 %v231
    %1181 = vmatpush.bf16.msra.mxu0 %v227
    %1182 = vmatpush.bf16.msra.mxu0 %v223
    %1183 = vmatpush.bf16.msra.mxu0 %v219
    %1184 = vmatmul.bf16.gmra.mxu0 %v1133
    %v1185 = vpop.f32.mrf.mxu0
    %v1186 = vadd.f32 0.0, %v1185
    %v1187 = vpop.f32.mrf.mxu0
    %v1188 = vadd.f32 0.0, %v1187
    %1189 = vdwg.mxu0
    %v1190 = vadd.f32 %v1125, %v1144
    %v1191 = vadd.f32 %v1126, %v1158
    %v1192 = vadd.f32 %v1127, %v1172
    %v1193 = vadd.f32 %v1128, %v1186
    %v1194 = vadd.f32 %v1129, %v1146
    %v1195 = vadd.f32 %v1130, %v1160
    %v1196 = vadd.f32 %v1131, %v1174
    %v1197 = vadd.f32 %v1132, %v1188
    %v1198 = vmul.f32 %v1190, 0.5
    %v1199 = vmul.f32 %v1194, 0.5
    %v1200 = vtanh.pop %v1198
    %v1201 = vtanh.pop %v1199
    %v1202 = vmul.f32 %v1200, 0.5
    %v1203 = vmul.f32 %v1201, 0.5
    %v1204 = vadd.f32 %v1202, 0.5
    %v1205 = vadd.f32 %v1203, 0.5
    %v1206 = vmul.f32 %v1191, 0.5
    %v1207 = vmul.f32 %v1195, 0.5
    %v1208 = vtanh.pop %v1206
    %v1209 = vtanh.pop %v1207
    %v1210 = vmul.f32 %v1208, 0.5
    %v1211 = vmul.f32 %v1209, 0.5
    %v1212 = vadd.f32 %v1210, 0.5
    %v1213 = vadd.f32 %v1211, 0.5
    %v1214 = vtanh.pop %v1192
    %v1215 = vtanh.pop %v1196
    %v1216 = vmul.f32 %v1193, 0.5
    %v1217 = vmul.f32 %v1197, 0.5
    %v1218 = vtanh.pop %v1216
    %v1219 = vtanh.pop %v1217
    %v1220 = vmul.f32 %v1218, 0.5
    %v1221 = vmul.f32 %v1219, 0.5
    %v1222 = vadd.f32 %v1220, 0.5
    %v1223 = vadd.f32 %v1221, 0.5
    %v1224 = vld [vmem:[#allocation3] sm:$0xff]
    %v1225 = vld [vmem:[#allocation3 + $0x8] sm:$0xff]
    %v1226 = vmul.f32 %v1212, %v1224
    %v1227 = vmul.f32 %v1213, %v1225
    %v1228 = vmul.f32 %v1204, %v1214
    %v1229 = vmul.f32 %v1205, %v1215
    %v1230 = vadd.f32 %v1226, %v1228
    %v1231 = vadd.f32 %v1227, %v1229
    %1232 = vst [vmem:[#allocation3] sm:$0xff] %v1230
    %1233 = vst [vmem:[#allocation3 + $0x8] sm:$0xff] %v1231
    %v1234 = vtanh.pop %v1230
    %v1235 = vtanh.pop %v1231
    %v1236 = vmul.f32 %v1222, %v1234
    %v1237 = vmul.f32 %v1223, %v1235
    %1238 = vst [vmem:[#allocation2] sm:$0xff] %v1236
    %1239 = vst [vmem:[#allocation2 + $0x8] sm:$0xff] %v1237
    // Predicated region
    $region34: #{tpu_custom_call.1} parent=1 // pred_check
      %p1240 = pneg %p65
    $region35: #{tpu_custom_call.1} parent=1 // pred_check_branch
      %1242 = sbr.rel (%p1240) target = $region37
    $region36: #{tpu_custom_call.1} parent=1 // pred_region
      %v1243 = vld [vmem:[#allocation2] sm:$0xff]
      %v1244 = vld [vmem:[#allocation2 + $0x8] sm:$0xff]
      %v1245 = vpack.c.bf16 %v1244, %v1243
      %v1246 = vld [vmem:[#allocation9] sm:$0xf]
      %v1247 = vld [vmem:[#allocation9 + $0x4] sm:$0xf]
      %v1248 = vld [vmem:[#allocation9 + $0x8] sm:$0xf]
      %v1249 = vld [vmem:[#allocation9 + $0xc] sm:$0xf]
      %v1250 = vld [vmem:[#allocation9 + $0x10] sm:$0xf]
      %v1251 = vld [vmem:[#allocation9 + $0x14] sm:$0xf]
      %v1252 = vld [vmem:[#allocation9 + $0x18] sm:$0xf]
      %v1253 = vld [vmem:[#allocation9 + $0x1c] sm:$0xf]
      %v1254 = vld [vmem:[#allocation9 + $0x20] sm:$0xf]
      %v1255 = vld [vmem:[#allocation9 + $0x24] sm:$0xf]
      %v1256 = vld [vmem:[#allocation9 + $0x28] sm:$0xf]
      %v1257 = vld [vmem:[#allocation9 + $0x2c] sm:$0xf]
      %v1258 = vld [vmem:[#allocation9 + $0x30] sm:$0xf]
      %v1259 = vld [vmem:[#allocation9 + $0x34] sm:$0xf]
      %v1260 = vld [vmem:[#allocation9 + $0x38] sm:$0xf]
      %v1261 = vld [vmem:[#allocation9 + $0x3c] sm:$0xf]
      %v1262 = vld [vmem:[%s3] sm:$0x1]
      %v1264 = vperm.slane %v1262, 0
      %v1282 = vunpack.c.l.b16 %v1246
      %v1283 = vunpack.c.l.b16 %v1247
      %v1284 = vunpack.c.l.b16 %v1248
      %v1285 = vunpack.c.l.b16 %v1249
      %v1286 = vunpack.c.l.b16 %v1250
      %v1287 = vunpack.c.l.b16 %v1251
      %v1288 = vunpack.c.l.b16 %v1252
      %v1289 = vunpack.c.l.b16 %v1253
      %v1290 = vunpack.c.l.b16 %v1254
      %v1291 = vunpack.c.l.b16 %v1255
      %v1292 = vunpack.c.l.b16 %v1256
      %v1293 = vunpack.c.l.b16 %v1257
      %v1294 = vunpack.c.l.b16 %v1258
      %v1295 = vunpack.c.l.b16 %v1259
      %v1296 = vunpack.c.l.b16 %v1260
      %v1297 = vunpack.c.l.b16 %v1261
      %v1298 = vpack.c.b16 %v1283, %v1282
      %v1299 = vpack.c.b16 %v1285, %v1284
      %v1300 = vpack.c.b16 %v1287, %v1286
      %v1301 = vpack.c.b16 %v1289, %v1288
      %v1302 = vpack.c.b16 %v1291, %v1290
      %v1303 = vpack.c.b16 %v1293, %v1292
      %v1304 = vpack.c.b16 %v1295, %v1294
      %v1305 = vpack.c.b16 %v1297, %v1296
      %1314 = vmatpush.bf16.msra.mxu0 %v1305
      %1315 = vmatpush.bf16.msra.mxu0 %v1304
      %1316 = vmatpush.bf16.msra.mxu0 %v1303
      %1317 = vmatpush.bf16.msra.mxu0 %v1302
      %1318 = vmatpush.bf16.msra.mxu0 %v1301
      %1319 = vmatpush.bf16.msra.mxu0 %v1300
      %1320 = vmatpush.bf16.msra.mxu0 %v1299
      %1321 = vmatpush.bf16.msra.mxu0 %v1298
      %1322 = vmatmul.bf16.gmra.mxu0 %v1245
      %v1323 = vpop.f32.mrf.mxu0
      %v1324 = vadd.f32 %v1264, %v1323
      %v1325 = vpop.f32.mrf.mxu0
      %v1326 = vadd.f32 %v1264, %v1325
      %1327 = vdwg.mxu0
      %1328 = vst [vmem:[#allocation10] sm:$0xff] %v1324
      %1329 = vst [vmem:[#allocation10 + $0x8] sm:$0xff] %v1326
    $region37: #{tpu_custom_call.1} parent=1 // pred_fallthru
      _
    // Predicated region
    $region38: #{tpu_custom_call.1} parent=1 // pred_check
      _
    $region39: #{tpu_custom_call.1} parent=1 // pred_check_branch
      %1331 = sbr.rel (0) target = $region41
    $region40: #{tpu_custom_call.1} parent=1 // pred_region
      %1333 = vsyncadd [#allocation6], 0
      %s1334 = sshll.u32 [#allocation10], 4
      %s1335 = int_to_ptr.vmem [resolvable:$true] %s1334
      %s1336 = sshll.u32 %s4, 4
      %s1337 = int_to_ptr.hbm [resolvable:$true] %s1336
      %1342 = dma.vmem_to_hbm [thread:$0]  %s1335, 256, %s1337, [#allocation6], 128, 128, 8
    $region41: #{tpu_custom_call.1} parent=1 // pred_fallthru
      _
    // Predicated region
    $region42: #{tpu_custom_call.1} parent=1 // pred_check
      _
    $region43: #{tpu_custom_call.1} parent=1 // pred_check_branch
      %1344 = sbr.rel (0) target = $region45
    $region44: #{tpu_custom_call.1} parent=1 // pred_region
      %1346 = dma.done [#allocation6], 256
    $region45: #{tpu_custom_call.1} parent=1 // pred_fallthru
      _
    %1347 = vsyncpa [#allocation5], 1
    %1348 = vsyncpa [#allocation8], 1
    %1349 = vsyncpa [#allocation6], 1

</llo_original>
